<compile_context>
chip_gen: v7x
topology: tpu7x:2x2x1
jax: 0.10.0
libtpu: 0.0.40
codegen_flags: <defaults>
</compile_context>

<pallas_src>
import jax
import jax.numpy as jnp
from jax.experimental import pallas as pl
from jax.experimental.pallas import tpu as pltpu


def _round_up(x, m):
    return (x + m - 1) // m * m


# ---------------------------------------------------------------------------
# Pallas kernels
# ---------------------------------------------------------------------------
def _linear_kernel(x_ref, w_ref, b_ref, o_ref):
    """o = x @ w + b for one row tile. bf16 operands, f32 accumulate/epilogue."""
    acc = jnp.dot(x_ref[...], w_ref[...], preferred_element_type=jnp.float32)
    o_ref[...] = (acc + b_ref[...]).astype(o_ref.dtype)


def pallas_linear(x, w, b, *, tm=512):
    """y = x @ w + b with x:(M,K) f32, w:(K,N) f32, b:(N,) -> (M,N) f32.

    Tiled over rows with block (tm, K); weight/bias resident across the grid.
    Operands are cast to bf16 (HBM-bandwidth-bound path); accumulation is f32.
    """
    M, K = x.shape
    _, N = w.shape

    # Row tile: big enough to pipeline, multiple of 8 (sublane), never larger
    # than the (padded) row count.  pt_dim=N stays lane-dense (>=128 or full).
    tm = min(tm, _round_up(M, 8))
    M_pad = _round_up(M, tm)
    if M_pad != M:
        x = jnp.pad(x, ((0, M_pad - M), (0, 0)))

    xb = x.astype(jnp.bfloat16)
    wb = w.astype(jnp.bfloat16)
    b2d = b.reshape(1, N).astype(jnp.float32)

    grid_m = M_pad // tm
    cost = pl.CostEstimate(
        flops=2 * M_pad * K * N,
        transcendentals=0,
        bytes_accessed=M_pad * K * 2 + K * N * 2 + N * 4 + M_pad * N * 4,
    )

    out = pl.pallas_call(
        _linear_kernel,
        out_shape=jax.ShapeDtypeStruct((M_pad, N), jnp.float32),
        grid_spec=pltpu.PrefetchScalarGridSpec(
            num_scalar_prefetch=0,
            grid=(grid_m,),
            in_specs=[
                pl.BlockSpec((tm, K), lambda i: (i, 0)),   # streamed row tiles
                pl.BlockSpec((K, N), lambda i: (0, 0)),    # resident weight
                pl.BlockSpec((1, N), lambda i: (0, 0)),    # resident bias
            ],
            out_specs=pl.BlockSpec((tm, N), lambda i: (i, 0)),
        ),
        compiler_params=pltpu.CompilerParams(
            # Row tiles are independent -> shard across v7x's two TensorCores.
            dimension_semantics=("parallel",)),
        cost_estimate=cost,
    )(xb, wb, b2d)

    return out[:M] if M_pad != M else out


def _head_kernel(x_ref, w1_ref, b1_ref, w2_ref, b2_ref, o_ref):
    """Fused classifier head: o = relu(x @ w1 + b1) @ w2 + b2 (single block)."""
    h = jnp.dot(x_ref[...], w1_ref[...], preferred_element_type=jnp.float32)
    h = jnp.maximum(h + b1_ref[...], 0.0)  # F.relu, f32 epilogue
    out = jnp.dot(h, w2_ref[...], preferred_element_type=jnp.float32)
    o_ref[...] = (out + b2_ref[...]).astype(o_ref.dtype)


def pallas_classifier_head(x, w1, b1, w2, b2):
    """x:(B,D) -> relu(x@w1+b1)@w2+b2 : (B,n_classes).

    B is small (one row per bag); keep a single grid=(1,) fused kernel — the
    work is microseconds and not worth tiling.
    """
    B, D = x.shape
    K = w1.shape[1]
    C = w2.shape[1]
    return pl.pallas_call(
        _head_kernel,
        out_shape=jax.ShapeDtypeStruct((B, C), jnp.float32),
        grid_spec=pltpu.PrefetchScalarGridSpec(
            num_scalar_prefetch=0,
            grid=(1,),
            in_specs=[
                pl.BlockSpec((B, D), lambda i: (0, 0)),
                pl.BlockSpec((D, K), lambda i: (0, 0)),
                pl.BlockSpec((1, K), lambda i: (0, 0)),
                pl.BlockSpec((K, C), lambda i: (0, 0)),
                pl.BlockSpec((1, C), lambda i: (0, 0)),
            ],
            out_specs=pl.BlockSpec((B, C), lambda i: (0, 0)),
        ),
        compiler_params=pltpu.CompilerParams(
            dimension_semantics=("arbitrary",)),
    )(x, w1, b1.reshape(1, K), w2, b2.reshape(1, C))


# ---------------------------------------------------------------------------
# CSS_MIL forward (glue in plain JAX around the Pallas kernels)
# ---------------------------------------------------------------------------
def init_params(key, *, n_classes, num_cls_token, pt_dim, K=512, in_dim=1024):
    ks = jax.random.split(key, 8)
    params = {
        # nn.Linear(1024, pt_dim) — stored as (in, out), i.e. torch weight.T
        "w_map": jax.random.normal(ks[0], (in_dim, pt_dim), jnp.float32) * 0.02,
        "b_map": jax.random.normal(ks[1], (pt_dim,), jnp.float32) * 0.01,
        # ParameterList of (1, 1, pt_dim) randn cls tokens
        "cls_tokens": jax.random.normal(ks[2], (num_cls_token, 1, 1, pt_dim),
                                        jnp.float32),
        # nn.Linear(num_cls_token * pt_dim * 2, K)
        "w1": jax.random.normal(ks[3], (num_cls_token * pt_dim * 2, K),
                                jnp.float32) * 0.02,
        "b1": jax.random.normal(ks[4], (K,), jnp.float32) * 0.01,
        # nn.Linear(K, n_classes)
        "w2": jax.random.normal(ks[5], (K, n_classes), jnp.float32) * 0.02,
        "b2": jax.random.normal(ks[6], (n_classes,), jnp.float32) * 0.01,
    }
    return params


def css_mil_forward(params, x, h5_path=None):
    """x: (B, N, 1024) float32.  h5_path is unused (only consumed by RC_Mamba)."""
    B, N, Din = x.shape
    pt_dim = params["w_map"].shape[1]
    num_cls = params["cls_tokens"].shape[0]

    # 1) x = self.map(x)   — tiled Pallas matmul kernel (bf16 operands, f32 acc)
    x_flat = x.reshape(B * N, Din)
    xm = pallas_linear(x_flat, params["w_map"], params["b_map"])
    xm = xm.reshape(B, N, pt_dim)

    # 2) INSERT_cls_token
    # TODO(synk): rc_mamba_utils.INSERT_cls_token source not provided; assuming
    # evenly-spaced insertion (cls token i placed at the head of chunk i).
    assert N % num_cls == 0
    chunk = N // num_cls
    pieces, pos, cur = [], [], 0
    for i in range(num_cls):
        tok = jnp.broadcast_to(params["cls_tokens"][i], (B, 1, pt_dim))
        pieces.append(tok)
        pos.append(cur)
        pieces.append(xm[:, i * chunk:(i + 1) * chunk, :])
        cur += 1 + chunk
    seq = jnp.concatenate(pieces, axis=1)                      # (B, N+num_cls, pt_dim)
    cls_token_pos_index = jnp.array(pos, dtype=jnp.int32)

    # 3/4) y = self.rc_mamba(...); cls_tokens = Get_cls_tokens(y, pos)
    # TODO(synk): RC_Mamba (bidirectional selective SSM, d_state=128, d_conv=4,
    # expand=2) source not provided; substituting an identity forward/reverse
    # feature concat.  Because the placeholder is identity, the 2x feature
    # duplication is applied only to the gathered cls tokens instead of
    # materializing concat([seq, seq], -1) over the full sequence (same math).
    cls = seq[:, cls_token_pos_index, :]                       # (B, num_cls, pt_dim)
    cls_dup = jnp.concatenate([cls, cls], axis=-1)             # (B, num_cls, 2*pt_dim)
    flat = cls_dup.reshape(B, num_cls * pt_dim * 2)

    # 5/6) classifier1 -> ReLU -> classifier2  — fused Pallas kernel
    logits = pallas_classifier_head(flat, params["w1"], params["b1"],
                                    params["w2"], params["b2"])
    return logits


# NOTE: AttentionPooling / self.att_pool is constructed in __init__ but never
# invoked in CSS_MIL.forward, so it is intentionally not part of the kernel path.


if __name__ == "__main__":
    # Small, deterministic example consistent with the forward pass.
    B, N, IN_DIM = 1, 16, 1024
    PT_DIM, NUM_CLS_TOKEN, N_CLASSES = 128, 2, 2

    key = jax.random.PRNGKey(0)
    k_params, k_x = jax.random.split(key)
    params = init_params(k_params, n_classes=N_CLASSES,
                         num_cls_token=NUM_CLS_TOKEN, pt_dim=PT_DIM)
    x = jax.random.normal(k_x, (B, N, IN_DIM), jnp.float32)

    fwd = jax.jit(lambda p, xx: css_mil_forward(p, xx))
    logits = fwd(params, x)
    logits = jax.block_until_ready(logits)

    print("------logits------")
    print(logits)
    assert logits.shape == (B, N_CLASSES)
    assert bool(jnp.all(jnp.isfinite(logits)))
    print("KERNEL_OK")
</pallas_src>

<mosaic_0001>
module attributes {stable_mosaic.version = 11 : i64} {
  func.func @_linear_kernel(%arg0: i32, %arg1: memref<16x1024xbf16, #tpu.memory_space<vmem>>, %arg2: memref<1024x128xbf16, #tpu.memory_space<vmem>>, %arg3: memref<1x128xf32, #tpu.memory_space<vmem>>, %arg4: memref<16x128xf32, #tpu.memory_space<vmem>>) attributes {dimension_semantics = [#tpu.dimension_semantics<parallel>], iteration_bounds = array<i64: 1>, scalar_prefetch = 0 : i64, scratch_operands = 0 : i64, tpu.core_type = #tpu.core_type<tc>, window_params = [{transform_indices = @transform_0, window_bounds = array<i64: 16, 1024>}, {pipeline_mode = #tpu.pipeline_mode<synchronous>, transform_indices = @transform_1, window_bounds = array<i64: 1024, 128>}, {pipeline_mode = #tpu.pipeline_mode<synchronous>, transform_indices = @transform_2, window_bounds = array<i64: 1, 128>}, {transform_indices = @transform_3, window_bounds = array<i64: 16, 128>}]} {
    %c0 = arith.constant 0 : index
    %c0_0 = arith.constant 0 : index
    %0 = vector.load %arg1[%c0, %c0_0] : memref<16x1024xbf16, #tpu.memory_space<vmem>>, vector<16x1024xbf16>
    %c0_1 = arith.constant 0 : index
    %c0_2 = arith.constant 0 : index
    %1 = vector.load %arg2[%c0_1, %c0_2] : memref<1024x128xbf16, #tpu.memory_space<vmem>>, vector<1024x128xbf16>
    %cst = arith.constant dense<0.000000e+00> : vector<16x128xf32>
    %2 = tpu.matmul %0, %1, %cst {dimension_numbers = #tpu.dot_dimension_numbers<[1], [0], [0], [1], [0, 0, 1, 1], [], []>} : vector<16x1024xbf16>, vector<1024x128xbf16>, vector<16x128xf32> -> vector<16x128xf32>
    %c0_3 = arith.constant 0 : index
    %c0_4 = arith.constant 0 : index
    %3 = vector.load %arg3[%c0_3, %c0_4] : memref<1x128xf32, #tpu.memory_space<vmem>>, vector<1x128xf32>
    %4 = vector.broadcast %3 : vector<1x128xf32> to vector<16x128xf32>
    %5 = arith.addf %2, %4 : vector<16x128xf32>
    %c0_5 = arith.constant 0 : index
    %c0_6 = arith.constant 0 : index
    %6 = vector.load %arg4[%c0_5, %c0_6] : memref<16x128xf32, #tpu.memory_space<vmem>>, vector<16x128xf32>
    tpu.vector_store %arg4[%c0_5, %c0_6], %5 {strides = array<i32>} : memref<16x128xf32, #tpu.memory_space<vmem>>, vector<16x128xf32>,
    return
  }
  func.func @transform_0(%arg0: i32) -> (i32, i32) {
    %c0_i32 = arith.constant 0 : i32
    %c0_i32_0 = arith.constant 0 : i32
    return %arg0, %c0_i32 : i32, i32
  }
  func.func @transform_1(%arg0: i32) -> (i32, i32) {
    %c0_i32 = arith.constant 0 : i32
    %c0_i32_0 = arith.constant 0 : i32
    %c0_i32_1 = arith.constant 0 : i32
    return %c0_i32, %c0_i32_0 : i32, i32
  }
  func.func @transform_2(%arg0: i32) -> (i32, i32) {
    %c0_i32 = arith.constant 0 : i32
    %c0_i32_0 = arith.constant 0 : i32
    %c0_i32_1 = arith.constant 0 : i32
    return %c0_i32, %c0_i32_0 : i32, i32
  }
  func.func @transform_3(%arg0: i32) -> (i32, i32) {
    %c0_i32 = arith.constant 0 : i32
    %c0_i32_0 = arith.constant 0 : i32
    return %arg0, %c0_i32 : i32, i32
  }
}

module attributes {stable_mosaic.version = 11 : i64} {
  func.func @_head_kernel(%arg0: i32, %arg1: memref<1x512xf32, #tpu.memory_space<vmem>>, %arg2: memref<512x512xf32, #tpu.memory_space<vmem>>, %arg3: memref<1x512xf32, #tpu.memory_space<vmem>>, %arg4: memref<512x2xf32, #tpu.memory_space<vmem>>, %arg5: memref<1x2xf32, #tpu.memory_space<vmem>>, %arg6: memref<1x2xf32, #tpu.memory_space<vmem>>) attributes {dimension_semantics = [#tpu.dimension_semantics<arbitrary>], iteration_bounds = array<i64: 1>, scalar_prefetch = 0 : i64, scratch_operands = 0 : i64, tpu.core_type = #tpu.core_type<tc>, window_params = [{pipeline_mode = #tpu.pipeline_mode<synchronous>, transform_indices = @transform_0, window_bounds = array<i64: 1, 512>}, {pipeline_mode = #tpu.pipeline_mode<synchronous>, transform_indices = @transform_1, window_bounds = array<i64: 512, 512>}, {pipeline_mode = #tpu.pipeline_mode<synchronous>, transform_indices = @transform_2, window_bounds = array<i64: 1, 512>}, {pipeline_mode = #tpu.pipeline_mode<synchronous>, transform_indices = @transform_3, window_bounds = array<i64: 512, 2>}, {pipeline_mode = #tpu.pipeline_mode<synchronous>, transform_indices = @transform_4, window_bounds = array<i64: 1, 2>}, {pipeline_mode = #tpu.pipeline_mode<synchronous>, transform_indices = @transform_5, window_bounds = array<i64: 1, 2>}]} {
    %c0 = arith.constant 0 : index
    %c0_0 = arith.constant 0 : index
    %0 = vector.load %arg1[%c0, %c0_0] : memref<1x512xf32, #tpu.memory_space<vmem>>, vector<1x512xf32>
    %c0_1 = arith.constant 0 : index
    %c0_2 = arith.constant 0 : index
    %1 = vector.load %arg2[%c0_1, %c0_2] : memref<512x512xf32, #tpu.memory_space<vmem>>, vector<512x512xf32>
    %cst = arith.constant dense<0.000000e+00> : vector<1x512xf32>
    %2 = tpu.matmul %0, %1, %cst {dimension_numbers = #tpu.dot_dimension_numbers<[1], [0], [0], [1], [0, 0, 1, 1], [], []>} : vector<1x512xf32>, vector<512x512xf32>, vector<1x512xf32> -> vector<1x512xf32>
    %c0_3 = arith.constant 0 : index
    %c0_4 = arith.constant 0 : index
    %3 = vector.load %arg3[%c0_3, %c0_4] : memref<1x512xf32, #tpu.memory_space<vmem>>, vector<1x512xf32>
    %4 = arith.addf %2, %3 : vector<1x512xf32>
    %cst_5 = arith.constant 0.000000e+00 : f32
    %5 = vector.broadcast %cst_5 : f32 to vector<1x512xf32>
    %6 = arith.maximumf %4, %5 : vector<1x512xf32>
    %c0_6 = arith.constant 0 : index
    %c0_7 = arith.constant 0 : index
    %7 = vector.load %arg4[%c0_6, %c0_7] : memref<512x2xf32, #tpu.memory_space<vmem>>, vector<512x2xf32>
    %cst_8 = arith.constant dense<0.000000e+00> : vector<1x2xf32>
    %8 = tpu.matmul %6, %7, %cst_8 {dimension_numbers = #tpu.dot_dimension_numbers<[1], [0], [0], [1], [0, 0, 1, 1], [], []>} : vector<1x512xf32>, vector<512x2xf32>, vector<1x2xf32> -> vector<1x2xf32>
    %c0_9 = arith.constant 0 : index
    %c0_10 = arith.constant 0 : index
    %9 = vector.load %arg5[%c0_9, %c0_10] : memref<1x2xf32, #tpu.memory_space<vmem>>, vector<1x2xf32>
    %10 = arith.addf %8, %9 : vector<1x2xf32>
    %c0_11 = arith.constant 0 : index
    %c0_12 = arith.constant 0 : index
    %11 = vector.load %arg6[%c0_11, %c0_12] : memref<1x2xf32, #tpu.memory_space<vmem>>, vector<1x2xf32>
    tpu.vector_store %arg6[%c0_11, %c0_12], %10 {strides = array<i32>} : memref<1x2xf32, #tpu.memory_space<vmem>>, vector<1x2xf32>,
    return
  }
  func.func @transform_0(%arg0: i32) -> (i32, i32) {
    %c0_i32 = arith.constant 0 : i32
    %c0_i32_0 = arith.constant 0 : i32
    %c0_i32_1 = arith.constant 0 : i32
    return %c0_i32, %c0_i32_0 : i32, i32
  }
  func.func @transform_1(%arg0: i32) -> (i32, i32) {
    %c0_i32 = arith.constant 0 : i32
    %c0_i32_0 = arith.constant 0 : i32
    %c0_i32_1 = arith.constant 0 : i32
    return %c0_i32, %c0_i32_0 : i32, i32
  }
  func.func @transform_2(%arg0: i32) -> (i32, i32) {
    %c0_i32 = arith.constant 0 : i32
    %c0_i32_0 = arith.constant 0 : i32
    %c0_i32_1 = arith.constant 0 : i32
    return %c0_i32, %c0_i32_0 : i32, i32
  }
  func.func @transform_3(%arg0: i32) -> (i32, i32) {
    %c0_i32 = arith.constant 0 : i32
    %c0_i32_0 = arith.constant 0 : i32
    %c0_i32_1 = arith.constant 0 : i32
    return %c0_i32, %c0_i32_0 : i32, i32
  }
  func.func @transform_4(%arg0: i32) -> (i32, i32) {
    %c0_i32 = arith.constant 0 : i32
    %c0_i32_0 = arith.constant 0 : i32
    %c0_i32_1 = arith.constant 0 : i32
    return %c0_i32, %c0_i32_0 : i32, i32
  }
  func.func @transform_5(%arg0: i32) -> (i32, i32) {
    %c0_i32 = arith.constant 0 : i32
    %c0_i32_0 = arith.constant 0 : i32
    %c0_i32_1 = arith.constant 0 : i32
    return %c0_i32, %c0_i32_0 : i32, i32
  }
}

</mosaic_0001>

<llo_original>
// kernel: _lambda_.2
$region0: #{_lambda_.2}
  #allocation0 [shape = 'u32[]', space=smem, size = 0x4, offset = 0x4, fixed_abs, tag = 'smem constant byte address 0x4 - core index']
  #allocation1 [shape = 'u32[144,128]{1,0:T(1,128)}', space=vmem, size = 0x12000, scoped, tag = 'internal scratch']
  %s0 = inlined_call_operand.vmem [shape: bf16[16,1024], index: 0, kind: input, shape index: {}]
  %s1 = inlined_call_operand.vmem [shape: bf16[1024,128], index: 1, kind: input, shape index: {}]
  %s2 = inlined_call_operand.vmem [shape: f32[1,128], index: 2, kind: input, shape index: {}]
  %s3 = inlined_call_operand.vmem [shape: f32[16,128], index: 3, kind: output, shape index: {}]
  %s4 = sld [smem:[#allocation0]]
  $region22: #{_lambda_.2} parent=0
    _
  %s6 = ssub.s32 1, %s4
  %s7 = scalar_select 0, %s6, %s4
  // Predicated region
  $region2: #{_lambda_.2} parent=0 // pred_check
    _
  $region3: #{_lambda_.2} parent=0 // pred_check_branch
    %9 = sbr.rel (0) target = $region5
  $region4: #{_lambda_.2} parent=0 // pred_region
    _
  $region5: #{_lambda_.2} parent=0 // pred_fallthru
    _
  // Predicated region
  $region6: #{_lambda_.2} parent=0 // pred_check
    _
  $region7: #{_lambda_.2} parent=0 // pred_check_branch
    %11 = sbr.rel (0) target = $region9
  $region8: #{_lambda_.2} parent=0 // pred_region
    _
  $region9: #{_lambda_.2} parent=0 // pred_fallthru
    _
  // Predicated region
  $region10: #{_lambda_.2} parent=0 // pred_check
    _
  $region11: #{_lambda_.2} parent=0 // pred_check_branch
    %13 = sbr.rel (0) target = $region13
  $region12: #{_lambda_.2} parent=0 // pred_region
    _
  $region13: #{_lambda_.2} parent=0 // pred_fallthru
    _
  %v15 = vld [vmem:[%s0] sm:$0xff]
  %v16 = vld [vmem:[%s0 + $0x8] sm:$0xff]
  %v17 = vld [vmem:[%s0 + $0x10] sm:$0xff]
  %v18 = vld [vmem:[%s0 + $0x18] sm:$0xff]
  %v19 = vld [vmem:[%s0 + $0x20] sm:$0xff]
  %v20 = vld [vmem:[%s0 + $0x28] sm:$0xff]
  %v21 = vld [vmem:[%s0 + $0x30] sm:$0xff]
  %v22 = vld [vmem:[%s0 + $0x38] sm:$0xff]
  %v23 = vld [vmem:[%s1] sm:$0xf]
  %v24 = vld [vmem:[%s1 + $0x4] sm:$0xf]
  %v25 = vld [vmem:[%s1 + $0x8] sm:$0xf]
  %v26 = vld [vmem:[%s1 + $0xc] sm:$0xf]
  %v27 = vld [vmem:[%s1 + $0x10] sm:$0xf]
  %v28 = vld [vmem:[%s1 + $0x14] sm:$0xf]
  %v29 = vld [vmem:[%s1 + $0x18] sm:$0xf]
  %v30 = vld [vmem:[%s1 + $0x1c] sm:$0xf]
  %v31 = vld [vmem:[%s1 + $0x20] sm:$0xf]
  %v32 = vld [vmem:[%s1 + $0x24] sm:$0xf]
  %v33 = vld [vmem:[%s1 + $0x28] sm:$0xf]
  %v34 = vld [vmem:[%s1 + $0x2c] sm:$0xf]
  %v35 = vld [vmem:[%s1 + $0x30] sm:$0xf]
  %v36 = vld [vmem:[%s1 + $0x34] sm:$0xf]
  %v37 = vld [vmem:[%s1 + $0x38] sm:$0xf]
  %v38 = vld [vmem:[%s1 + $0x3c] sm:$0xf]
  %v39 = vld [vmem:[%s1 + $0x40] sm:$0xf]
  %v40 = vld [vmem:[%s1 + $0x44] sm:$0xf]
  %v41 = vld [vmem:[%s1 + $0x48] sm:$0xf]
  %v42 = vld [vmem:[%s1 + $0x4c] sm:$0xf]
  %v43 = vld [vmem:[%s1 + $0x50] sm:$0xf]
  %v44 = vld [vmem:[%s1 + $0x54] sm:$0xf]
  %v45 = vld [vmem:[%s1 + $0x58] sm:$0xf]
  %v46 = vld [vmem:[%s1 + $0x5c] sm:$0xf]
  %v47 = vld [vmem:[%s1 + $0x60] sm:$0xf]
  %v48 = vld [vmem:[%s1 + $0x64] sm:$0xf]
  %v49 = vld [vmem:[%s1 + $0x68] sm:$0xf]
  %v50 = vld [vmem:[%s1 + $0x6c] sm:$0xf]
  %v51 = vld [vmem:[%s1 + $0x70] sm:$0xf]
  %v52 = vld [vmem:[%s1 + $0x74] sm:$0xf]
  %v53 = vld [vmem:[%s1 + $0x78] sm:$0xf]
  %v54 = vld [vmem:[%s1 + $0x7c] sm:$0xf]
  %v55 = vld [vmem:[%s1 + $0x80] sm:$0xf]
  %v56 = vld [vmem:[%s1 + $0x84] sm:$0xf]
  %v57 = vld [vmem:[%s1 + $0x88] sm:$0xf]
  %v58 = vld [vmem:[%s1 + $0x8c] sm:$0xf]
  %v59 = vld [vmem:[%s1 + $0x90] sm:$0xf]
  %v60 = vld [vmem:[%s1 + $0x94] sm:$0xf]
  %v61 = vld [vmem:[%s1 + $0x98] sm:$0xf]
  %v62 = vld [vmem:[%s1 + $0x9c] sm:$0xf]
  %v63 = vld [vmem:[%s1 + $0xa0] sm:$0xf]
  %v64 = vld [vmem:[%s1 + $0xa4] sm:$0xf]
  %v65 = vld [vmem:[%s1 + $0xa8] sm:$0xf]
  %v66 = vld [vmem:[%s1 + $0xac] sm:$0xf]
  %v67 = vld [vmem:[%s1 + $0xb0] sm:$0xf]
  %v68 = vld [vmem:[%s1 + $0xb4] sm:$0xf]
  %v69 = vld [vmem:[%s1 + $0xb8] sm:$0xf]
  %v70 = vld [vmem:[%s1 + $0xbc] sm:$0xf]
  %v71 = vld [vmem:[%s1 + $0xc0] sm:$0xf]
  %v72 = vld [vmem:[%s1 + $0xc4] sm:$0xf]
  %v73 = vld [vmem:[%s1 + $0xc8] sm:$0xf]
  %v74 = vld [vmem:[%s1 + $0xcc] sm:$0xf]
  %v75 = vld [vmem:[%s1 + $0xd0] sm:$0xf]
  %v76 = vld [vmem:[%s1 + $0xd4] sm:$0xf]
  %v77 = vld [vmem:[%s1 + $0xd8] sm:$0xf]
  %v78 = vld [vmem:[%s1 + $0xdc] sm:$0xf]
  %v79 = vld [vmem:[%s1 + $0xe0] sm:$0xf]
  %v80 = vld [vmem:[%s1 + $0xe4] sm:$0xf]
  %v81 = vld [vmem:[%s1 + $0xe8] sm:$0xf]
  %v82 = vld [vmem:[%s1 + $0xec] sm:$0xf]
  %v83 = vld [vmem:[%s1 + $0xf0] sm:$0xf]
  %v84 = vld [vmem:[%s1 + $0xf4] sm:$0xf]
  %v85 = vld [vmem:[%s1 + $0xf8] sm:$0xf]
  %v86 = vld [vmem:[%s1 + $0xfc] sm:$0xf]
  %v87 = vld [vmem:[%s1 + $0x100] sm:$0xf]
  %v88 = vld [vmem:[%s1 + $0x104] sm:$0xf]
  %v89 = vld [vmem:[%s1 + $0x108] sm:$0xf]
  %v90 = vld [vmem:[%s1 + $0x10c] sm:$0xf]
  %v91 = vld [vmem:[%s1 + $0x110] sm:$0xf]
  %v92 = vld [vmem:[%s1 + $0x114] sm:$0xf]
  %v93 = vld [vmem:[%s1 + $0x118] sm:$0xf]
  %v94 = vld [vmem:[%s1 + $0x11c] sm:$0xf]
  %v95 = vld [vmem:[%s1 + $0x120] sm:$0xf]
  %v96 = vld [vmem:[%s1 + $0x124] sm:$0xf]
  %v97 = vld [vmem:[%s1 + $0x128] sm:$0xf]
  %v98 = vld [vmem:[%s1 + $0x12c] sm:$0xf]
  %v99 = vld [vmem:[%s1 + $0x130] sm:$0xf]
  %v100 = vld [vmem:[%s1 + $0x134] sm:$0xf]
  %v101 = vld [vmem:[%s1 + $0x138] sm:$0xf]
  %v102 = vld [vmem:[%s1 + $0x13c] sm:$0xf]
  %v103 = vld [vmem:[%s1 + $0x140] sm:$0xf]
  %v104 = vld [vmem:[%s1 + $0x144] sm:$0xf]
  %v105 = vld [vmem:[%s1 + $0x148] sm:$0xf]
  %v106 = vld [vmem:[%s1 + $0x14c] sm:$0xf]
  %v107 = vld [vmem:[%s1 + $0x150] sm:$0xf]
  %v108 = vld [vmem:[%s1 + $0x154] sm:$0xf]
  %v109 = vld [vmem:[%s1 + $0x158] sm:$0xf]
  %v110 = vld [vmem:[%s1 + $0x15c] sm:$0xf]
  %v111 = vld [vmem:[%s1 + $0x160] sm:$0xf]
  %v112 = vld [vmem:[%s1 + $0x164] sm:$0xf]
  %v113 = vld [vmem:[%s1 + $0x168] sm:$0xf]
  %v114 = vld [vmem:[%s1 + $0x16c] sm:$0xf]
  %v115 = vld [vmem:[%s1 + $0x170] sm:$0xf]
  %v116 = vld [vmem:[%s1 + $0x174] sm:$0xf]
  %v117 = vld [vmem:[%s1 + $0x178] sm:$0xf]
  %v118 = vld [vmem:[%s1 + $0x17c] sm:$0xf]
  %v119 = vld [vmem:[%s1 + $0x180] sm:$0xf]
  %v120 = vld [vmem:[%s1 + $0x184] sm:$0xf]
  %v121 = vld [vmem:[%s1 + $0x188] sm:$0xf]
  %v122 = vld [vmem:[%s1 + $0x18c] sm:$0xf]
  %v123 = vld [vmem:[%s1 + $0x190] sm:$0xf]
  %v124 = vld [vmem:[%s1 + $0x194] sm:$0xf]
  %v125 = vld [vmem:[%s1 + $0x198] sm:$0xf]
  %v126 = vld [vmem:[%s1 + $0x19c] sm:$0xf]
  %v127 = vld [vmem:[%s1 + $0x1a0] sm:$0xf]
  %v128 = vld [vmem:[%s1 + $0x1a4] sm:$0xf]
  %v129 = vld [vmem:[%s1 + $0x1a8] sm:$0xf]
  %v130 = vld [vmem:[%s1 + $0x1ac] sm:$0xf]
  %v131 = vld [vmem:[%s1 + $0x1b0] sm:$0xf]
  %v132 = vld [vmem:[%s1 + $0x1b4] sm:$0xf]
  %v133 = vld [vmem:[%s1 + $0x1b8] sm:$0xf]
  %v134 = vld [vmem:[%s1 + $0x1bc] sm:$0xf]
  %v135 = vld [vmem:[%s1 + $0x1c0] sm:$0xf]
  %v136 = vld [vmem:[%s1 + $0x1c4] sm:$0xf]
  %v137 = vld [vmem:[%s1 + $0x1c8] sm:$0xf]
  %v138 = vld [vmem:[%s1 + $0x1cc] sm:$0xf]
  %v139 = vld [vmem:[%s1 + $0x1d0] sm:$0xf]
  %v140 = vld [vmem:[%s1 + $0x1d4] sm:$0xf]
  %v141 = vld [vmem:[%s1 + $0x1d8] sm:$0xf]
  %v142 = vld [vmem:[%s1 + $0x1dc] sm:$0xf]
  %v143 = vld [vmem:[%s1 + $0x1e0] sm:$0xf]
  %v144 = vld [vmem:[%s1 + $0x1e4] sm:$0xf]
  %v145 = vld [vmem:[%s1 + $0x1e8] sm:$0xf]
  %v146 = vld [vmem:[%s1 + $0x1ec] sm:$0xf]
  %v147 = vld [vmem:[%s1 + $0x1f0] sm:$0xf]
  %v148 = vld [vmem:[%s1 + $0x1f4] sm:$0xf]
  %v149 = vld [vmem:[%s1 + $0x1f8] sm:$0xf]
  %v150 = vld [vmem:[%s1 + $0x1fc] sm:$0xf]
  %v151 = vld [vmem:[%s2] sm:$0x1]
  %v153 = vlaneseq
  %v154 = vshrl.u32 %v153, 7
  %v155 = vsub.s32 0, %v154
  %v156 = vrot.slane %v151, %v155
  %v166 = vunpack.c.l.b16 %v15
  %v167 = vunpack.c.h.b16 %v15
  %v168 = vunpack.c.l.b16 %v16
  %v169 = vunpack.c.h.b16 %v16
  %v170 = vunpack.c.l.b16 %v17
  %v171 = vunpack.c.h.b16 %v17
  %v172 = vunpack.c.l.b16 %v18
  %v173 = vunpack.c.h.b16 %v18
  %v174 = vunpack.c.l.b16 %v19
  %v175 = vunpack.c.h.b16 %v19
  %v176 = vunpack.c.l.b16 %v20
  %v177 = vunpack.c.h.b16 %v20
  %v178 = vunpack.c.l.b16 %v21
  %v179 = vunpack.c.h.b16 %v21
  %v180 = vunpack.c.l.b16 %v22
  %v181 = vunpack.c.h.b16 %v22
  %v182 = vpack.c.b16 %v174, %v166
  %v183 = vpack.c.b16 %v175, %v167
  %v184 = vpack.c.b16 %v176, %v168
  %v185 = vpack.c.b16 %v177, %v169
  %v186 = vpack.c.b16 %v178, %v170
  %v187 = vpack.c.b16 %v179, %v171
  %v188 = vpack.c.b16 %v180, %v172
  %v189 = vpack.c.b16 %v181, %v173
  %v326 = vunpack.c.l.b16 %v23
  %v327 = vunpack.c.l.b16 %v24
  %v328 = vunpack.c.l.b16 %v25
  %v329 = vunpack.c.l.b16 %v26
  %v330 = vunpack.c.l.b16 %v27
  %v331 = vunpack.c.l.b16 %v28
  %v332 = vunpack.c.l.b16 %v29
  %v333 = vunpack.c.l.b16 %v30
  %v334 = vunpack.c.l.b16 %v31
  %v335 = vunpack.c.l.b16 %v32
  %v336 = vunpack.c.l.b16 %v33
  %v337 = vunpack.c.l.b16 %v34
  %v338 = vunpack.c.l.b16 %v35
  %v339 = vunpack.c.l.b16 %v36
  %v340 = vunpack.c.l.b16 %v37
  %v341 = vunpack.c.l.b16 %v38
  %v342 = vunpack.c.l.b16 %v39
  %v343 = vunpack.c.l.b16 %v40
  %v344 = vunpack.c.l.b16 %v41
  %v345 = vunpack.c.l.b16 %v42
  %v346 = vunpack.c.l.b16 %v43
  %v347 = vunpack.c.l.b16 %v44
  %v348 = vunpack.c.l.b16 %v45
  %v349 = vunpack.c.l.b16 %v46
  %v350 = vunpack.c.l.b16 %v47
  %v351 = vunpack.c.l.b16 %v48
  %v352 = vunpack.c.l.b16 %v49
  %v353 = vunpack.c.l.b16 %v50
  %v354 = vunpack.c.l.b16 %v51
  %v355 = vunpack.c.l.b16 %v52
  %v356 = vunpack.c.l.b16 %v53
  %v357 = vunpack.c.l.b16 %v54
  %v358 = vunpack.c.l.b16 %v55
  %v359 = vunpack.c.l.b16 %v56
  %v360 = vunpack.c.l.b16 %v57
  %v361 = vunpack.c.l.b16 %v58
  %v362 = vunpack.c.l.b16 %v59
  %v363 = vunpack.c.l.b16 %v60
  %v364 = vunpack.c.l.b16 %v61
  %v365 = vunpack.c.l.b16 %v62
  %v366 = vunpack.c.l.b16 %v63
  %v367 = vunpack.c.l.b16 %v64
  %v368 = vunpack.c.l.b16 %v65
  %v369 = vunpack.c.l.b16 %v66
  %v370 = vunpack.c.l.b16 %v67
  %v371 = vunpack.c.l.b16 %v68
  %v372 = vunpack.c.l.b16 %v69
  %v373 = vunpack.c.l.b16 %v70
  %v374 = vunpack.c.l.b16 %v71
  %v375 = vunpack.c.l.b16 %v72
  %v376 = vunpack.c.l.b16 %v73
  %v377 = vunpack.c.l.b16 %v74
  %v378 = vunpack.c.l.b16 %v75
  %v379 = vunpack.c.l.b16 %v76
  %v380 = vunpack.c.l.b16 %v77
  %v381 = vunpack.c.l.b16 %v78
  %v382 = vunpack.c.l.b16 %v79
  %v383 = vunpack.c.l.b16 %v80
  %v384 = vunpack.c.l.b16 %v81
  %v385 = vunpack.c.l.b16 %v82
  %v386 = vunpack.c.l.b16 %v83
  %v387 = vunpack.c.l.b16 %v84
  %v388 = vunpack.c.l.b16 %v85
  %v389 = vunpack.c.l.b16 %v86
  %v390 = vunpack.c.l.b16 %v87
  %v391 = vunpack.c.l.b16 %v88
  %v392 = vunpack.c.l.b16 %v89
  %v393 = vunpack.c.l.b16 %v90
  %v394 = vunpack.c.l.b16 %v91
  %v395 = vunpack.c.l.b16 %v92
  %v396 = vunpack.c.l.b16 %v93
  %v397 = vunpack.c.l.b16 %v94
  %v398 = vunpack.c.l.b16 %v95
  %v399 = vunpack.c.l.b16 %v96
  %v400 = vunpack.c.l.b16 %v97
  %v401 = vunpack.c.l.b16 %v98
  %v402 = vunpack.c.l.b16 %v99
  %v403 = vunpack.c.l.b16 %v100
  %v404 = vunpack.c.l.b16 %v101
  %v405 = vunpack.c.l.b16 %v102
  %v406 = vunpack.c.l.b16 %v103
  %v407 = vunpack.c.l.b16 %v104
  %v408 = vunpack.c.l.b16 %v105
  %v409 = vunpack.c.l.b16 %v106
  %v410 = vunpack.c.l.b16 %v107
  %v411 = vunpack.c.l.b16 %v108
  %v412 = vunpack.c.l.b16 %v109
  %v413 = vunpack.c.l.b16 %v110
  %v414 = vunpack.c.l.b16 %v111
  %v415 = vunpack.c.l.b16 %v112
  %v416 = vunpack.c.l.b16 %v113
  %v417 = vunpack.c.l.b16 %v114
  %v418 = vunpack.c.l.b16 %v115
  %v419 = vunpack.c.l.b16 %v116
  %v420 = vunpack.c.l.b16 %v117
  %v421 = vunpack.c.l.b16 %v118
  %v422 = vunpack.c.l.b16 %v119
  %v423 = vunpack.c.l.b16 %v120
  %v424 = vunpack.c.l.b16 %v121
  %v425 = vunpack.c.l.b16 %v122
  %v426 = vunpack.c.l.b16 %v123
  %v427 = vunpack.c.l.b16 %v124
  %v428 = vunpack.c.l.b16 %v125
  %v429 = vunpack.c.l.b16 %v126
  %v430 = vunpack.c.l.b16 %v127
  %v431 = vunpack.c.l.b16 %v128
  %v432 = vunpack.c.l.b16 %v129
  %v433 = vunpack.c.l.b16 %v130
  %v434 = vunpack.c.l.b16 %v131
  %v435 = vunpack.c.l.b16 %v132
  %v436 = vunpack.c.l.b16 %v133
  %v437 = vunpack.c.l.b16 %v134
  %v438 = vunpack.c.l.b16 %v135
  %v439 = vunpack.c.l.b16 %v136
  %v440 = vunpack.c.l.b16 %v137
  %v441 = vunpack.c.l.b16 %v138
  %v442 = vunpack.c.l.b16 %v139
  %v443 = vunpack.c.l.b16 %v140
  %v444 = vunpack.c.l.b16 %v141
  %v445 = vunpack.c.l.b16 %v142
  %v446 = vunpack.c.l.b16 %v143
  %v447 = vunpack.c.l.b16 %v144
  %v448 = vunpack.c.l.b16 %v145
  %v449 = vunpack.c.l.b16 %v146
  %v450 = vunpack.c.l.b16 %v147
  %v451 = vunpack.c.l.b16 %v148
  %v452 = vunpack.c.l.b16 %v149
  %v453 = vunpack.c.l.b16 %v150
  %v454 = vpack.c.b16 %v327, %v326
  %v455 = vpack.c.b16 %v329, %v328
  %v456 = vpack.c.b16 %v331, %v330
  %v457 = vpack.c.b16 %v333, %v332
  %v458 = vpack.c.b16 %v335, %v334
  %v459 = vpack.c.b16 %v337, %v336
  %v460 = vpack.c.b16 %v339, %v338
  %v461 = vpack.c.b16 %v341, %v340
  %v462 = vpack.c.b16 %v343, %v342
  %v463 = vpack.c.b16 %v345, %v344
  %v464 = vpack.c.b16 %v347, %v346
  %v465 = vpack.c.b16 %v349, %v348
  %v466 = vpack.c.b16 %v351, %v350
  %v467 = vpack.c.b16 %v353, %v352
  %v468 = vpack.c.b16 %v355, %v354
  %v469 = vpack.c.b16 %v357, %v356
  %v470 = vpack.c.b16 %v359, %v358
  %v471 = vpack.c.b16 %v361, %v360
  %v472 = vpack.c.b16 %v363, %v362
  %v473 = vpack.c.b16 %v365, %v364
  %v474 = vpack.c.b16 %v367, %v366
  %v475 = vpack.c.b16 %v369, %v368
  %v476 = vpack.c.b16 %v371, %v370
  %v477 = vpack.c.b16 %v373, %v372
  %v478 = vpack.c.b16 %v375, %v374
  %v479 = vpack.c.b16 %v377, %v376
  %v480 = vpack.c.b16 %v379, %v378
  %v481 = vpack.c.b16 %v381, %v380
  %v482 = vpack.c.b16 %v383, %v382
  %v483 = vpack.c.b16 %v385, %v384
  %v484 = vpack.c.b16 %v387, %v386
  %v485 = vpack.c.b16 %v389, %v388
  %v486 = vpack.c.b16 %v391, %v390
  %v487 = vpack.c.b16 %v393, %v392
  %v488 = vpack.c.b16 %v395, %v394
  %v489 = vpack.c.b16 %v397, %v396
  %v490 = vpack.c.b16 %v399, %v398
  %v491 = vpack.c.b16 %v401, %v400
  %v492 = vpack.c.b16 %v403, %v402
  %v493 = vpack.c.b16 %v405, %v404
  %v494 = vpack.c.b16 %v407, %v406
  %v495 = vpack.c.b16 %v409, %v408
  %v496 = vpack.c.b16 %v411, %v410
  %v497 = vpack.c.b16 %v413, %v412
  %v498 = vpack.c.b16 %v415, %v414
  %v499 = vpack.c.b16 %v417, %v416
  %v500 = vpack.c.b16 %v419, %v418
  %v501 = vpack.c.b16 %v421, %v420
  %v502 = vpack.c.b16 %v423, %v422
  %v503 = vpack.c.b16 %v425, %v424
  %v504 = vpack.c.b16 %v427, %v426
  %v505 = vpack.c.b16 %v429, %v428
  %v506 = vpack.c.b16 %v431, %v430
  %v507 = vpack.c.b16 %v433, %v432
  %v508 = vpack.c.b16 %v435, %v434
  %v509 = vpack.c.b16 %v437, %v436
  %v510 = vpack.c.b16 %v439, %v438
  %v511 = vpack.c.b16 %v441, %v440
  %v512 = vpack.c.b16 %v443, %v442
  %v513 = vpack.c.b16 %v445, %v444
  %v514 = vpack.c.b16 %v447, %v446
  %v515 = vpack.c.b16 %v449, %v448
  %v516 = vpack.c.b16 %v451, %v450
  %v517 = vpack.c.b16 %v453, %v452
  %582 = vmatprep.subr.bf16.mxu0 0
  %583 = vmatpush1.bf16.msra.mxu0 %v454
  %584 = vmatprep.subr.bf16.mxu0 0
  %585 = vmatpush1.bf16.msra.mxu0 %v455
  %586 = vmatprep.subr.bf16.mxu0 0
  %587 = vmatpush1.bf16.msra.mxu0 %v456
  %588 = vmatprep.subr.bf16.mxu0 0
  %589 = vmatpush1.bf16.msra.mxu0 %v457
  %590 = vmatprep.subr.bf16.mxu0 0
  %591 = vmatpush1.bf16.msra.mxu0 %v458
  %592 = vmatprep.subr.bf16.mxu0 0
  %593 = vmatpush1.bf16.msra.mxu0 %v459
  %594 = vmatprep.subr.bf16.mxu0 0
  %595 = vmatpush1.bf16.msra.mxu0 %v460
  %596 = vmatprep.subr.bf16.mxu0 0
  %597 = vmatpush1.bf16.msra.mxu0 %v461
  %598 = vmatprep.subr.bf16.mxu0 0
  %599 = vmatpush1.bf16.msra.mxu0 %v462
  %600 = vmatprep.subr.bf16.mxu0 0
  %601 = vmatpush1.bf16.msra.mxu0 %v463
  %602 = vmatprep.subr.bf16.mxu0 0
  %603 = vmatpush1.bf16.msra.mxu0 %v464
  %604 = vmatprep.subr.bf16.mxu0 0
  %605 = vmatpush1.bf16.msra.mxu0 %v465
  %606 = vmatprep.subr.bf16.mxu0 0
  %607 = vmatpush1.bf16.msra.mxu0 %v466
  %608 = vmatprep.subr.bf16.mxu0 0
  %609 = vmatpush1.bf16.msra.mxu0 %v467
  %610 = vmatprep.subr.bf16.mxu0 0
  %611 = vmatpush1.bf16.msra.mxu0 %v468
  %612 = vmatprep.subr.bf16.mxu0 0
  %613 = vmatpush1.bf16.msra.mxu0 %v469
  %614 = vmatprep.mubr.bf16.mxu0 %v183
  %615 = vmatmul.mubr.bf16.gmra.mrb[0].mxu0 %v182
  %v616 = vpop.f32.mrb[0].mxu0
  %v617 = vadd.f32 %v156, %v616
  %v618 = vpop.f32.mrb[0].mxu0
  %v619 = vpop.f32.mrb[0].mxu0
  %v620 = vadd.f32 %v156, %v619
  %v621 = vpop.f32.mrb[0].mxu0
  %622 = vdwg.mxu0
  %623 = vmatprep.subr.bf16.mxu0 0
  %624 = vmatpush1.bf16.msra.mxu0 %v470
  %625 = vmatprep.subr.bf16.mxu0 0
  %626 = vmatpush1.bf16.msra.mxu0 %v471
  %627 = vmatprep.subr.bf16.mxu0 0
  %628 = vmatpush1.bf16.msra.mxu0 %v472
  %629 = vmatprep.subr.bf16.mxu0 0
  %630 = vmatpush1.bf16.msra.mxu0 %v473
  %631 = vmatprep.subr.bf16.mxu0 0
  %632 = vmatpush1.bf16.msra.mxu0 %v474
  %633 = vmatprep.subr.bf16.mxu0 0
  %634 = vmatpush1.bf16.msra.mxu0 %v475
  %635 = vmatprep.subr.bf16.mxu0 0
  %636 = vmatpush1.bf16.msra.mxu0 %v476
  %637 = vmatprep.subr.bf16.mxu0 0
  %638 = vmatpush1.bf16.msra.mxu0 %v477
  %639 = vmatprep.subr.bf16.mxu0 0
  %640 = vmatpush1.bf16.msra.mxu0 %v478
  %641 = vmatprep.subr.bf16.mxu0 0
  %642 = vmatpush1.bf16.msra.mxu0 %v479
  %643 = vmatprep.subr.bf16.mxu0 0
  %644 = vmatpush1.bf16.msra.mxu0 %v480
  %645 = vmatprep.subr.bf16.mxu0 0
  %646 = vmatpush1.bf16.msra.mxu0 %v481
  %647 = vmatprep.subr.bf16.mxu0 0
  %648 = vmatpush1.bf16.msra.mxu0 %v482
  %649 = vmatprep.subr.bf16.mxu0 0
  %650 = vmatpush1.bf16.msra.mxu0 %v483
  %651 = vmatprep.subr.bf16.mxu0 0
  %652 = vmatpush1.bf16.msra.mxu0 %v484
  %653 = vmatprep.subr.bf16.mxu0 0
  %654 = vmatpush1.bf16.msra.mxu0 %v485
  %655 = vmatprep.mubr.bf16.mxu0 %v185
  %656 = vmatmul.mubr.bf16.gmra.mrb[0].mxu0 %v184
  %v657 = vpop.f32.mrb[0].mxu0
  %v658 = vadd.f32 %v617, %v657
  %v659 = vpop.f32.mrb[0].mxu0
  %v660 = vpop.f32.mrb[0].mxu0
  %v661 = vadd.f32 %v620, %v660
  %v662 = vpop.f32.mrb[0].mxu0
  %663 = vdwg.mxu0
  %664 = vmatprep.subr.bf16.mxu0 0
  %665 = vmatpush1.bf16.msra.mxu0 %v486
  %666 = vmatprep.subr.bf16.mxu0 0
  %667 = vmatpush1.bf16.msra.mxu0 %v487
  %668 = vmatprep.subr.bf16.mxu0 0
  %669 = vmatpush1.bf16.msra.mxu0 %v488
  %670 = vmatprep.subr.bf16.mxu0 0
  %671 = vmatpush1.bf16.msra.mxu0 %v489
  %672 = vmatprep.subr.bf16.mxu0 0
  %673 = vmatpush1.bf16.msra.mxu0 %v490
  %674 = vmatprep.subr.bf16.mxu0 0
  %675 = vmatpush1.bf16.msra.mxu0 %v491
  %676 = vmatprep.subr.bf16.mxu0 0
  %677 = vmatpush1.bf16.msra.mxu0 %v492
  %678 = vmatprep.subr.bf16.mxu0 0
  %679 = vmatpush1.bf16.msra.mxu0 %v493
  %680 = vmatprep.subr.bf16.mxu0 0
  %681 = vmatpush1.bf16.msra.mxu0 %v494
  %682 = vmatprep.subr.bf16.mxu0 0
  %683 = vmatpush1.bf16.msra.mxu0 %v495
  %684 = vmatprep.subr.bf16.mxu0 0
  %685 = vmatpush1.bf16.msra.mxu0 %v496
  %686 = vmatprep.subr.bf16.mxu0 0
  %687 = vmatpush1.bf16.msra.mxu0 %v497
  %688 = vmatprep.subr.bf16.mxu0 0
  %689 = vmatpush1.bf16.msra.mxu0 %v498
  %690 = vmatprep.subr.bf16.mxu0 0
  %691 = vmatpush1.bf16.msra.mxu0 %v499
  %692 = vmatprep.subr.bf16.mxu0 0
  %693 = vmatpush1.bf16.msra.mxu0 %v500
  %694 = vmatprep.subr.bf16.mxu0 0
  %695 = vmatpush1.bf16.msra.mxu0 %v501
  %696 = vmatprep.mubr.bf16.mxu0 %v187
  %697 = vmatmul.mubr.bf16.gmra.mrb[0].mxu0 %v186
  %v698 = vpop.f32.mrb[0].mxu0
  %v699 = vadd.f32 %v658, %v698
  %v700 = vpop.f32.mrb[0].mxu0
  %v701 = vpop.f32.mrb[0].mxu0
  %v702 = vadd.f32 %v661, %v701
  %v703 = vpop.f32.mrb[0].mxu0
  %704 = vdwg.mxu0
  %705 = vmatprep.subr.bf16.mxu0 0
  %706 = vmatpush1.bf16.msra.mxu0 %v502
  %707 = vmatprep.subr.bf16.mxu0 0
  %708 = vmatpush1.bf16.msra.mxu0 %v503
  %709 = vmatprep.subr.bf16.mxu0 0
  %710 = vmatpush1.bf16.msra.mxu0 %v504
  %711 = vmatprep.subr.bf16.mxu0 0
  %712 = vmatpush1.bf16.msra.mxu0 %v505
  %713 = vmatprep.subr.bf16.mxu0 0
  %714 = vmatpush1.bf16.msra.mxu0 %v506
  %715 = vmatprep.subr.bf16.mxu0 0
  %716 = vmatpush1.bf16.msra.mxu0 %v507
  %717 = vmatprep.subr.bf16.mxu0 0
  %718 = vmatpush1.bf16.msra.mxu0 %v508
  %719 = vmatprep.subr.bf16.mxu0 0
  %720 = vmatpush1.bf16.msra.mxu0 %v509
  %721 = vmatprep.subr.bf16.mxu0 0
  %722 = vmatpush1.bf16.msra.mxu0 %v510
  %723 = vmatprep.subr.bf16.mxu0 0
  %724 = vmatpush1.bf16.msra.mxu0 %v511
  %725 = vmatprep.subr.bf16.mxu0 0
  %726 = vmatpush1.bf16.msra.mxu0 %v512
  %727 = vmatprep.subr.bf16.mxu0 0
  %728 = vmatpush1.bf16.msra.mxu0 %v513
  %729 = vmatprep.subr.bf16.mxu0 0
  %730 = vmatpush1.bf16.msra.mxu0 %v514
  %731 = vmatprep.subr.bf16.mxu0 0
  %732 = vmatpush1.bf16.msra.mxu0 %v515
  %733 = vmatprep.subr.bf16.mxu0 0
  %734 = vmatpush1.bf16.msra.mxu0 %v516
  %735 = vmatprep.subr.bf16.mxu0 0
  %736 = vmatpush1.bf16.msra.mxu0 %v517
  %737 = vmatprep.mubr.bf16.mxu0 %v189
  %738 = vmatmul.mubr.bf16.gmra.mrb[0].mxu0 %v188
  %v739 = vpop.f32.mrb[0].mxu0
  %v740 = vadd.f32 %v699, %v739
  %v741 = vpop.f32.mrb[0].mxu0
  %v742 = vpop.f32.mrb[0].mxu0
  %v743 = vadd.f32 %v702, %v742
  %v744 = vpop.f32.mrb[0].mxu0
  %745 = vdwg.mxu0
  %746 = vst [vmem:[%s3] sm:$0xff] %v740
  %747 = vst [vmem:[%s3 + $0x8] sm:$0xff] %v743
  // Predicated region
  $region14: #{_lambda_.2} parent=0 // pred_check
    _
  $region15: #{_lambda_.2} parent=0 // pred_check_branch
    %749 = sbr.rel (0) target = $region17
  $region16: #{_lambda_.2} parent=0 // pred_region
    _
  $region17: #{_lambda_.2} parent=0 // pred_fallthru
    _
  // Predicated region
  $region18: #{_lambda_.2} parent=0 // pred_check
    _
  $region19: #{_lambda_.2} parent=0 // pred_check_branch
    %751 = sbr.rel (0) target = $region21
  $region20: #{_lambda_.2} parent=0 // pred_region
    _
  $region21: #{_lambda_.2} parent=0 // pred_fallthru
    _

// kernel: _lambda_.3
$region0: #{_lambda_.3}
  #allocation0 [shape = 'u32[]', space=smem, size = 0x4, offset = 0x4, fixed_abs, tag = 'smem constant byte address 0x4 - core index']
  #allocation1 [shape = 'u32[144,128]{1,0:T(1,128)}', space=vmem, size = 0x12000, scoped, tag = 'internal scratch']
  %s0 = inlined_call_operand.vmem [shape: f32[1,512], index: 0, kind: input, shape index: {}]
  %s1 = inlined_call_operand.vmem [shape: f32[512,512], index: 1, kind: input, shape index: {}]
  %s2 = inlined_call_operand.vmem [shape: f32[1,512], index: 2, kind: input, shape index: {}]
  %s3 = inlined_call_operand.vmem [shape: f32[512,2], index: 3, kind: input, shape index: {}]
  %s4 = inlined_call_operand.vmem [shape: f32[1,2], index: 4, kind: input, shape index: {}]
  %s5 = inlined_call_operand.hbm [shape: f32[1,2], index: 5, kind: output, shape index: {}]
  %s6 = sld [smem:[#allocation0]]
  $region30: #{_lambda_.3} parent=0
    _
  %s8 = ssub.s32 1, %s6
  %s9 = scalar_select 0, %s8, %s6
  $region1: #{_lambda_.3} parent=0
    #allocation2 [shape = 'u8[512]{0}', space=vmem, size = 0x400, scoped, tag = 'output window, operand 0, single buffered']
    #allocation3 [shape = 's32[1]{0}', space=sflag, size = 0x4, scoped, tag = 'scoped memory for _lambda_.3']
    %10 = vsyncpa [#allocation3], 0
    // Predicated region
    $region2: #{_lambda_.3} parent=1 // pred_check
      _
    $region3: #{_lambda_.3} parent=1 // pred_check_branch
      %12 = sbr.rel (0) target = $region5
    $region4: #{_lambda_.3} parent=1 // pred_region
      _
    $region5: #{_lambda_.3} parent=1 // pred_fallthru
      _
    // Predicated region
    $region6: #{_lambda_.3} parent=1 // pred_check
      _
    $region7: #{_lambda_.3} parent=1 // pred_check_branch
      %14 = sbr.rel (0) target = $region9
    $region8: #{_lambda_.3} parent=1 // pred_region
      _
    $region9: #{_lambda_.3} parent=1 // pred_fallthru
      _
    // Predicated region
    $region10: #{_lambda_.3} parent=1 // pred_check
      _
    $region11: #{_lambda_.3} parent=1 // pred_check_branch
      %16 = sbr.rel (0) target = $region13
    $region12: #{_lambda_.3} parent=1 // pred_region
      _
    $region13: #{_lambda_.3} parent=1 // pred_fallthru
      _
    // Predicated region
    $region14: #{_lambda_.3} parent=1 // pred_check
      _
    $region15: #{_lambda_.3} parent=1 // pred_check_branch
      %18 = sbr.rel (0) target = $region17
    $region16: #{_lambda_.3} parent=1 // pred_region
      _
    $region17: #{_lambda_.3} parent=1 // pred_fallthru
      _
    // Predicated region
    $region18: #{_lambda_.3} parent=1 // pred_check
      _
    $region19: #{_lambda_.3} parent=1 // pred_check_branch
      %20 = sbr.rel (0) target = $region21
    $region20: #{_lambda_.3} parent=1 // pred_region
      _
    $region21: #{_lambda_.3} parent=1 // pred_fallthru
      _
    %v21 = vld [vmem:[%s0] sm:$0xf]
    %v22 = vld [vmem:[%s1] sm:$0xff]
    %v23 = vld [vmem:[%s1 + $0x8] sm:$0xff]
    %v24 = vld [vmem:[%s1 + $0x10] sm:$0xff]
    %v25 = vld [vmem:[%s1 + $0x18] sm:$0xff]
    %v26 = vld [vmem:[%s1 + $0x20] sm:$0xff]
    %v27 = vld [vmem:[%s1 + $0x28] sm:$0xff]
    %v28 = vld [vmem:[%s1 + $0x30] sm:$0xff]
    %v29 = vld [vmem:[%s1 + $0x38] sm:$0xff]
    %v30 = vld [vmem:[%s1 + $0x40] sm:$0xff]
    %v31 = vld [vmem:[%s1 + $0x48] sm:$0xff]
    %v32 = vld [vmem:[%s1 + $0x50] sm:$0xff]
    %v33 = vld [vmem:[%s1 + $0x58] sm:$0xff]
    %v34 = vld [vmem:[%s1 + $0x60] sm:$0xff]
    %v35 = vld [vmem:[%s1 + $0x68] sm:$0xff]
    %v36 = vld [vmem:[%s1 + $0x70] sm:$0xff]
    %v37 = vld [vmem:[%s1 + $0x78] sm:$0xff]
    %v38 = vld [vmem:[%s1 + $0x80] sm:$0xff]
    %v39 = vld [vmem:[%s1 + $0x88] sm:$0xff]
    %v40 = vld [vmem:[%s1 + $0x90] sm:$0xff]
    %v41 = vld [vmem:[%s1 + $0x98] sm:$0xff]
    %v42 = vld [vmem:[%s1 + $0xa0] sm:$0xff]
    %v43 = vld [vmem:[%s1 + $0xa8] sm:$0xff]
    %v44 = vld [vmem:[%s1 + $0xb0] sm:$0xff]
    %v45 = vld [vmem:[%s1 + $0xb8] sm:$0xff]
    %v46 = vld [vmem:[%s1 + $0xc0] sm:$0xff]
    %v47 = vld [vmem:[%s1 + $0xc8] sm:$0xff]
    %v48 = vld [vmem:[%s1 + $0xd0] sm:$0xff]
    %v49 = vld [vmem:[%s1 + $0xd8] sm:$0xff]
    %v50 = vld [vmem:[%s1 + $0xe0] sm:$0xff]
    %v51 = vld [vmem:[%s1 + $0xe8] sm:$0xff]
    %v52 = vld [vmem:[%s1 + $0xf0] sm:$0xff]
    %v53 = vld [vmem:[%s1 + $0xf8] sm:$0xff]
    %v54 = vld [vmem:[%s1 + $0x100] sm:$0xff]
    %v55 = vld [vmem:[%s1 + $0x108] sm:$0xff]
    %v56 = vld [vmem:[%s1 + $0x110] sm:$0xff]
    %v57 = vld [vmem:[%s1 + $0x118] sm:$0xff]
    %v58 = vld [vmem:[%s1 + $0x120] sm:$0xff]
    %v59 = vld [vmem:[%s1 + $0x128] sm:$0xff]
    %v60 = vld [vmem:[%s1 + $0x130] sm:$0xff]
    %v61 = vld [vmem:[%s1 + $0x138] sm:$0xff]
    %v62 = vld [vmem:[%s1 + $0x140] sm:$0xff]
    %v63 = vld [vmem:[%s1 + $0x148] sm:$0xff]
    %v64 = vld [vmem:[%s1 + $0x150] sm:$0xff]
    %v65 = vld [vmem:[%s1 + $0x158] sm:$0xff]
    %v66 = vld [vmem:[%s1 + $0x160] sm:$0xff]
    %v67 = vld [vmem:[%s1 + $0x168] sm:$0xff]
    %v68 = vld [vmem:[%s1 + $0x170] sm:$0xff]
    %v69 = vld [vmem:[%s1 + $0x178] sm:$0xff]
    %v70 = vld [vmem:[%s1 + $0x180] sm:$0xff]
    %v71 = vld [vmem:[%s1 + $0x188] sm:$0xff]
    %v72 = vld [vmem:[%s1 + $0x190] sm:$0xff]
    %v73 = vld [vmem:[%s1 + $0x198] sm:$0xff]
    %v74 = vld [vmem:[%s1 + $0x1a0] sm:$0xff]
    %v75 = vld [vmem:[%s1 + $0x1a8] sm:$0xff]
    %v76 = vld [vmem:[%s1 + $0x1b0] sm:$0xff]
    %v77 = vld [vmem:[%s1 + $0x1b8] sm:$0xff]
    %v78 = vld [vmem:[%s1 + $0x1c0] sm:$0xff]
    %v79 = vld [vmem:[%s1 + $0x1c8] sm:$0xff]
    %v80 = vld [vmem:[%s1 + $0x1d0] sm:$0xff]
    %v81 = vld [vmem:[%s1 + $0x1d8] sm:$0xff]
    %v82 = vld [vmem:[%s1 + $0x1e0] sm:$0xff]
    %v83 = vld [vmem:[%s1 + $0x1e8] sm:$0xff]
    %v84 = vld [vmem:[%s1 + $0x1f0] sm:$0xff]
    %v85 = vld [vmem:[%s1 + $0x1f8] sm:$0xff]
    %v86 = vld [vmem:[%s1 + $0x200] sm:$0xff]
    %v87 = vld [vmem:[%s1 + $0x208] sm:$0xff]
    %v88 = vld [vmem:[%s1 + $0x210] sm:$0xff]
    %v89 = vld [vmem:[%s1 + $0x218] sm:$0xff]
    %v90 = vld [vmem:[%s1 + $0x220] sm:$0xff]
    %v91 = vld [vmem:[%s1 + $0x228] sm:$0xff]
    %v92 = vld [vmem:[%s1 + $0x230] sm:$0xff]
    %v93 = vld [vmem:[%s1 + $0x238] sm:$0xff]
    %v94 = vld [vmem:[%s1 + $0x240] sm:$0xff]
    %v95 = vld [vmem:[%s1 + $0x248] sm:$0xff]
    %v96 = vld [vmem:[%s1 + $0x250] sm:$0xff]
    %v97 = vld [vmem:[%s1 + $0x258] sm:$0xff]
    %v98 = vld [vmem:[%s1 + $0x260] sm:$0xff]
    %v99 = vld [vmem:[%s1 + $0x268] sm:$0xff]
    %v100 = vld [vmem:[%s1 + $0x270] sm:$0xff]
    %v101 = vld [vmem:[%s1 + $0x278] sm:$0xff]
    %v102 = vld [vmem:[%s1 + $0x280] sm:$0xff]
    %v103 = vld [vmem:[%s1 + $0x288] sm:$0xff]
    %v104 = vld [vmem:[%s1 + $0x290] sm:$0xff]
    %v105 = vld [vmem:[%s1 + $0x298] sm:$0xff]
    %v106 = vld [vmem:[%s1 + $0x2a0] sm:$0xff]
    %v107 = vld [vmem:[%s1 + $0x2a8] sm:$0xff]
    %v108 = vld [vmem:[%s1 + $0x2b0] sm:$0xff]
    %v109 = vld [vmem:[%s1 + $0x2b8] sm:$0xff]
    %v110 = vld [vmem:[%s1 + $0x2c0] sm:$0xff]
    %v111 = vld [vmem:[%s1 + $0x2c8] sm:$0xff]
    %v112 = vld [vmem:[%s1 + $0x2d0] sm:$0xff]
    %v113 = vld [vmem:[%s1 + $0x2d8] sm:$0xff]
    %v114 = vld [vmem:[%s1 + $0x2e0] sm:$0xff]
    %v115 = vld [vmem:[%s1 + $0x2e8] sm:$0xff]
    %v116 = vld [vmem:[%s1 + $0x2f0] sm:$0xff]
    %v117 = vld [vmem:[%s1 + $0x2f8] sm:$0xff]
    %v118 = vld [vmem:[%s1 + $0x300] sm:$0xff]
    %v119 = vld [vmem:[%s1 + $0x308] sm:$0xff]
    %v120 = vld [vmem:[%s1 + $0x310] sm:$0xff]
    %v121 = vld [vmem:[%s1 + $0x318] sm:$0xff]
    %v122 = vld [vmem:[%s1 + $0x320] sm:$0xff]
    %v123 = vld [vmem:[%s1 + $0x328] sm:$0xff]
    %v124 = vld [vmem:[%s1 + $0x330] sm:$0xff]
    %v125 = vld [vmem:[%s1 + $0x338] sm:$0xff]
    %v126 = vld [vmem:[%s1 + $0x340] sm:$0xff]
    %v127 = vld [vmem:[%s1 + $0x348] sm:$0xff]
    %v128 = vld [vmem:[%s1 + $0x350] sm:$0xff]
    %v129 = vld [vmem:[%s1 + $0x358] sm:$0xff]
    %v130 = vld [vmem:[%s1 + $0x360] sm:$0xff]
    %v131 = vld [vmem:[%s1 + $0x368] sm:$0xff]
    %v132 = vld [vmem:[%s1 + $0x370] sm:$0xff]
    %v133 = vld [vmem:[%s1 + $0x378] sm:$0xff]
    %v134 = vld [vmem:[%s1 + $0x380] sm:$0xff]
    %v135 = vld [vmem:[%s1 + $0x388] sm:$0xff]
    %v136 = vld [vmem:[%s1 + $0x390] sm:$0xff]
    %v137 = vld [vmem:[%s1 + $0x398] sm:$0xff]
    %v138 = vld [vmem:[%s1 + $0x3a0] sm:$0xff]
    %v139 = vld [vmem:[%s1 + $0x3a8] sm:$0xff]
    %v140 = vld [vmem:[%s1 + $0x3b0] sm:$0xff]
    %v141 = vld [vmem:[%s1 + $0x3b8] sm:$0xff]
    %v142 = vld [vmem:[%s1 + $0x3c0] sm:$0xff]
    %v143 = vld [vmem:[%s1 + $0x3c8] sm:$0xff]
    %v144 = vld [vmem:[%s1 + $0x3d0] sm:$0xff]
    %v145 = vld [vmem:[%s1 + $0x3d8] sm:$0xff]
    %v146 = vld [vmem:[%s1 + $0x3e0] sm:$0xff]
    %v147 = vld [vmem:[%s1 + $0x3e8] sm:$0xff]
    %v148 = vld [vmem:[%s1 + $0x3f0] sm:$0xff]
    %v149 = vld [vmem:[%s1 + $0x3f8] sm:$0xff]
    %v150 = vld [vmem:[%s1 + $0x400] sm:$0xff]
    %v151 = vld [vmem:[%s1 + $0x408] sm:$0xff]
    %v152 = vld [vmem:[%s1 + $0x410] sm:$0xff]
    %v153 = vld [vmem:[%s1 + $0x418] sm:$0xff]
    %v154 = vld [vmem:[%s1 + $0x420] sm:$0xff]
    %v155 = vld [vmem:[%s1 + $0x428] sm:$0xff]
    %v156 = vld [vmem:[%s1 + $0x430] sm:$0xff]
    %v157 = vld [vmem:[%s1 + $0x438] sm:$0xff]
    %v158 = vld [vmem:[%s1 + $0x440] sm:$0xff]
    %v159 = vld [vmem:[%s1 + $0x448] sm:$0xff]
    %v160 = vld [vmem:[%s1 + $0x450] sm:$0xff]
    %v161 = vld [vmem:[%s1 + $0x458] sm:$0xff]
    %v162 = vld [vmem:[%s1 + $0x460] sm:$0xff]
    %v163 = vld [vmem:[%s1 + $0x468] sm:$0xff]
    %v164 = vld [vmem:[%s1 + $0x470] sm:$0xff]
    %v165 = vld [vmem:[%s1 + $0x478] sm:$0xff]
    %v166 = vld [vmem:[%s1 + $0x480] sm:$0xff]
    %v167 = vld [vmem:[%s1 + $0x488] sm:$0xff]
    %v168 = vld [vmem:[%s1 + $0x490] sm:$0xff]
    %v169 = vld [vmem:[%s1 + $0x498] sm:$0xff]
    %v170 = vld [vmem:[%s1 + $0x4a0] sm:$0xff]
    %v171 = vld [vmem:[%s1 + $0x4a8] sm:$0xff]
    %v172 = vld [vmem:[%s1 + $0x4b0] sm:$0xff]
    %v173 = vld [vmem:[%s1 + $0x4b8] sm:$0xff]
    %v174 = vld [vmem:[%s1 + $0x4c0] sm:$0xff]
    %v175 = vld [vmem:[%s1 + $0x4c8] sm:$0xff]
    %v176 = vld [vmem:[%s1 + $0x4d0] sm:$0xff]
    %v177 = vld [vmem:[%s1 + $0x4d8] sm:$0xff]
    %v178 = vld [vmem:[%s1 + $0x4e0] sm:$0xff]
    %v179 = vld [vmem:[%s1 + $0x4e8] sm:$0xff]
    %v180 = vld [vmem:[%s1 + $0x4f0] sm:$0xff]
    %v181 = vld [vmem:[%s1 + $0x4f8] sm:$0xff]
    %v182 = vld [vmem:[%s1 + $0x500] sm:$0xff]
    %v183 = vld [vmem:[%s1 + $0x508] sm:$0xff]
    %v184 = vld [vmem:[%s1 + $0x510] sm:$0xff]
    %v185 = vld [vmem:[%s1 + $0x518] sm:$0xff]
    %v186 = vld [vmem:[%s1 + $0x520] sm:$0xff]
    %v187 = vld [vmem:[%s1 + $0x528] sm:$0xff]
    %v188 = vld [vmem:[%s1 + $0x530] sm:$0xff]
    %v189 = vld [vmem:[%s1 + $0x538] sm:$0xff]
    %v190 = vld [vmem:[%s1 + $0x540] sm:$0xff]
    %v191 = vld [vmem:[%s1 + $0x548] sm:$0xff]
    %v192 = vld [vmem:[%s1 + $0x550] sm:$0xff]
    %v193 = vld [vmem:[%s1 + $0x558] sm:$0xff]
    %v194 = vld [vmem:[%s1 + $0x560] sm:$0xff]
    %v195 = vld [vmem:[%s1 + $0x568] sm:$0xff]
    %v196 = vld [vmem:[%s1 + $0x570] sm:$0xff]
    %v197 = vld [vmem:[%s1 + $0x578] sm:$0xff]
    %v198 = vld [vmem:[%s1 + $0x580] sm:$0xff]
    %v199 = vld [vmem:[%s1 + $0x588] sm:$0xff]
    %v200 = vld [vmem:[%s1 + $0x590] sm:$0xff]
    %v201 = vld [vmem:[%s1 + $0x598] sm:$0xff]
    %v202 = vld [vmem:[%s1 + $0x5a0] sm:$0xff]
    %v203 = vld [vmem:[%s1 + $0x5a8] sm:$0xff]
    %v204 = vld [vmem:[%s1 + $0x5b0] sm:$0xff]
    %v205 = vld [vmem:[%s1 + $0x5b8] sm:$0xff]
    %v206 = vld [vmem:[%s1 + $0x5c0] sm:$0xff]
    %v207 = vld [vmem:[%s1 + $0x5c8] sm:$0xff]
    %v208 = vld [vmem:[%s1 + $0x5d0] sm:$0xff]
    %v209 = vld [vmem:[%s1 + $0x5d8] sm:$0xff]
    %v210 = vld [vmem:[%s1 + $0x5e0] sm:$0xff]
    %v211 = vld [vmem:[%s1 + $0x5e8] sm:$0xff]
    %v212 = vld [vmem:[%s1 + $0x5f0] sm:$0xff]
    %v213 = vld [vmem:[%s1 + $0x5f8] sm:$0xff]
    %v214 = vld [vmem:[%s1 + $0x600] sm:$0xff]
    %v215 = vld [vmem:[%s1 + $0x608] sm:$0xff]
    %v216 = vld [vmem:[%s1 + $0x610] sm:$0xff]
    %v217 = vld [vmem:[%s1 + $0x618] sm:$0xff]
    %v218 = vld [vmem:[%s1 + $0x620] sm:$0xff]
    %v219 = vld [vmem:[%s1 + $0x628] sm:$0xff]
    %v220 = vld [vmem:[%s1 + $0x630] sm:$0xff]
    %v221 = vld [vmem:[%s1 + $0x638] sm:$0xff]
    %v222 = vld [vmem:[%s1 + $0x640] sm:$0xff]
    %v223 = vld [vmem:[%s1 + $0x648] sm:$0xff]
    %v224 = vld [vmem:[%s1 + $0x650] sm:$0xff]
    %v225 = vld [vmem:[%s1 + $0x658] sm:$0xff]
    %v226 = vld [vmem:[%s1 + $0x660] sm:$0xff]
    %v227 = vld [vmem:[%s1 + $0x668] sm:$0xff]
    %v228 = vld [vmem:[%s1 + $0x670] sm:$0xff]
    %v229 = vld [vmem:[%s1 + $0x678] sm:$0xff]
    %v230 = vld [vmem:[%s1 + $0x680] sm:$0xff]
    %v231 = vld [vmem:[%s1 + $0x688] sm:$0xff]
    %v232 = vld [vmem:[%s1 + $0x690] sm:$0xff]
    %v233 = vld [vmem:[%s1 + $0x698] sm:$0xff]
    %v234 = vld [vmem:[%s1 + $0x6a0] sm:$0xff]
    %v235 = vld [vmem:[%s1 + $0x6a8] sm:$0xff]
    %v236 = vld [vmem:[%s1 + $0x6b0] sm:$0xff]
    %v237 = vld [vmem:[%s1 + $0x6b8] sm:$0xff]
    %v238 = vld [vmem:[%s1 + $0x6c0] sm:$0xff]
    %v239 = vld [vmem:[%s1 + $0x6c8] sm:$0xff]
    %v240 = vld [vmem:[%s1 + $0x6d0] sm:$0xff]
    %v241 = vld [vmem:[%s1 + $0x6d8] sm:$0xff]
    %v242 = vld [vmem:[%s1 + $0x6e0] sm:$0xff]
    %v243 = vld [vmem:[%s1 + $0x6e8] sm:$0xff]
    %v244 = vld [vmem:[%s1 + $0x6f0] sm:$0xff]
    %v245 = vld [vmem:[%s1 + $0x6f8] sm:$0xff]
    %v246 = vld [vmem:[%s1 + $0x700] sm:$0xff]
    %v247 = vld [vmem:[%s1 + $0x708] sm:$0xff]
    %v248 = vld [vmem:[%s1 + $0x710] sm:$0xff]
    %v249 = vld [vmem:[%s1 + $0x718] sm:$0xff]
    %v250 = vld [vmem:[%s1 + $0x720] sm:$0xff]
    %v251 = vld [vmem:[%s1 + $0x728] sm:$0xff]
    %v252 = vld [vmem:[%s1 + $0x730] sm:$0xff]
    %v253 = vld [vmem:[%s1 + $0x738] sm:$0xff]
    %v254 = vld [vmem:[%s1 + $0x740] sm:$0xff]
    %v255 = vld [vmem:[%s1 + $0x748] sm:$0xff]
    %v256 = vld [vmem:[%s1 + $0x750] sm:$0xff]
    %v257 = vld [vmem:[%s1 + $0x758] sm:$0xff]
    %v258 = vld [vmem:[%s1 + $0x760] sm:$0xff]
    %v259 = vld [vmem:[%s1 + $0x768] sm:$0xff]
    %v260 = vld [vmem:[%s1 + $0x770] sm:$0xff]
    %v261 = vld [vmem:[%s1 + $0x778] sm:$0xff]
    %v262 = vld [vmem:[%s1 + $0x780] sm:$0xff]
    %v263 = vld [vmem:[%s1 + $0x788] sm:$0xff]
    %v264 = vld [vmem:[%s1 + $0x790] sm:$0xff]
    %v265 = vld [vmem:[%s1 + $0x798] sm:$0xff]
    %v266 = vld [vmem:[%s1 + $0x7a0] sm:$0xff]
    %v267 = vld [vmem:[%s1 + $0x7a8] sm:$0xff]
    %v268 = vld [vmem:[%s1 + $0x7b0] sm:$0xff]
    %v269 = vld [vmem:[%s1 + $0x7b8] sm:$0xff]
    %v270 = vld [vmem:[%s1 + $0x7c0] sm:$0xff]
    %v271 = vld [vmem:[%s1 + $0x7c8] sm:$0xff]
    %v272 = vld [vmem:[%s1 + $0x7d0] sm:$0xff]
    %v273 = vld [vmem:[%s1 + $0x7d8] sm:$0xff]
    %v274 = vld [vmem:[%s1 + $0x7e0] sm:$0xff]
    %v275 = vld [vmem:[%s1 + $0x7e8] sm:$0xff]
    %v276 = vld [vmem:[%s1 + $0x7f0] sm:$0xff]
    %v277 = vld [vmem:[%s1 + $0x7f8] sm:$0xff]
    %v278 = vld [vmem:[%s2] sm:$0xf]
    %v280 = vlaneseq
    %v281 = vshrl.u32 %v280, 7
    %v282 = vsub.s32 0, %v281
    %v283 = vrot.slane %v21, %v282
    %v284 = vlaneseq
    %v285 = vshrl.u32 %v284, 7
    %v286 = vsub.s32 1, %v285
    %v287 = vrot.slane %v21, %v286
    %v288 = vlaneseq
    %v289 = vshrl.u32 %v288, 7
    %v290 = vsub.s32 2, %v289
    %v291 = vrot.slane %v21, %v290
    %v292 = vlaneseq
    %v293 = vshrl.u32 %v292, 7
    %v294 = vsub.s32 3, %v293
    %v295 = vrot.slane %v21, %v294
    %v301 = vlaneseq
    %v302 = vshrl.u32 %v301, 7
    %v303 = vsub.s32 0, %v302
    %v304 = vrot.slane %v278, %v303
    %v305 = vlaneseq
    %v306 = vshrl.u32 %v305, 7
    %v307 = vsub.s32 1, %v306
    %v308 = vrot.slane %v278, %v307
    %v309 = vlaneseq
    %v310 = vshrl.u32 %v309, 7
    %v311 = vsub.s32 2, %v310
    %v312 = vrot.slane %v278, %v311
    %v313 = vlaneseq
    %v314 = vshrl.u32 %v313, 7
    %v315 = vsub.s32 3, %v314
    %v316 = vrot.slane %v278, %v315
    %321 = vmatprep.subr.mxu0 %v23
    %322 = vmatpush1.msra.mxu0 %v22
    %323 = vmatprep.subr.mxu0 %v27
    %324 = vmatpush1.msra.mxu0 %v26
    %325 = vmatprep.subr.mxu0 %v31
    %326 = vmatpush1.msra.mxu0 %v30
    %327 = vmatprep.subr.mxu0 %v35
    %328 = vmatpush1.msra.mxu0 %v34
    %329 = vmatprep.subr.mxu0 %v39
    %330 = vmatpush1.msra.mxu0 %v38
    %331 = vmatprep.subr.mxu0 %v43
    %332 = vmatpush1.msra.mxu0 %v42
    %333 = vmatprep.subr.mxu0 %v47
    %334 = vmatpush1.msra.mxu0 %v46
    %335 = vmatprep.subr.mxu0 %v51
    %336 = vmatpush1.msra.mxu0 %v50
    %337 = vmatprep.subr.mxu0 %v55
    %338 = vmatpush1.msra.mxu0 %v54
    %339 = vmatprep.subr.mxu0 %v59
    %340 = vmatpush1.msra.mxu0 %v58
    %341 = vmatprep.subr.mxu0 %v63
    %342 = vmatpush1.msra.mxu0 %v62
    %343 = vmatprep.subr.mxu0 %v67
    %344 = vmatpush1.msra.mxu0 %v66
    %345 = vmatprep.subr.mxu0 %v71
    %346 = vmatpush1.msra.mxu0 %v70
    %347 = vmatprep.subr.mxu0 %v75
    %348 = vmatpush1.msra.mxu0 %v74
    %349 = vmatprep.subr.mxu0 %v79
    %350 = vmatpush1.msra.mxu0 %v78
    %351 = vmatprep.subr.mxu0 %v83
    %352 = vmatpush1.msra.mxu0 %v82
    %353 = vmatprep.subr.mxu0 %v87
    %354 = vmatpush1.msra.mxu0 %v86
    %355 = vmatprep.subr.mxu0 %v91
    %356 = vmatpush1.msra.mxu0 %v90
    %357 = vmatprep.subr.mxu0 %v95
    %358 = vmatpush1.msra.mxu0 %v94
    %359 = vmatprep.subr.mxu0 %v99
    %360 = vmatpush1.msra.mxu0 %v98
    %361 = vmatprep.subr.mxu0 %v103
    %362 = vmatpush1.msra.mxu0 %v102
    %363 = vmatprep.subr.mxu0 %v107
    %364 = vmatpush1.msra.mxu0 %v106
    %365 = vmatprep.subr.mxu0 %v111
    %366 = vmatpush1.msra.mxu0 %v110
    %367 = vmatprep.subr.mxu0 %v115
    %368 = vmatpush1.msra.mxu0 %v114
    %369 = vmatprep.subr.mxu0 %v119
    %370 = vmatpush1.msra.mxu0 %v118
    %371 = vmatprep.subr.mxu0 %v123
    %372 = vmatpush1.msra.mxu0 %v122
    %373 = vmatprep.subr.mxu0 %v127
    %374 = vmatpush1.msra.mxu0 %v126
    %375 = vmatprep.subr.mxu0 %v131
    %376 = vmatpush1.msra.mxu0 %v130
    %377 = vmatprep.subr.mxu0 %v135
    %378 = vmatpush1.msra.mxu0 %v134
    %379 = vmatprep.subr.mxu0 %v139
    %380 = vmatpush1.msra.mxu0 %v138
    %381 = vmatprep.subr.mxu0 %v143
    %382 = vmatpush1.msra.mxu0 %v142
    %383 = vmatprep.subr.mxu0 %v147
    %384 = vmatpush1.msra.mxu0 %v146
    %385 = vmatprep.mubr.f32.mxu0 %v287
    %386 = vmatmul.mubr.f32.gmra.mrb[0].mxu0 %v283
    %v387 = vpop.f32.mrb[0].mxu0
    %v388 = vadd.f32 %v304, %v387
    %v389 = vpop.f32.mrb[0].mxu0
    %v390 = vadd.f32 %v308, %v389
    %391 = vdwg.mxu0
    %392 = vmatprep.subr.mxu0 %v151
    %393 = vmatpush1.msra.mxu0 %v150
    %394 = vmatprep.subr.mxu0 %v155
    %395 = vmatpush1.msra.mxu0 %v154
    %396 = vmatprep.subr.mxu0 %v159
    %397 = vmatpush1.msra.mxu0 %v158
    %398 = vmatprep.subr.mxu0 %v163
    %399 = vmatpush1.msra.mxu0 %v162
    %400 = vmatprep.subr.mxu0 %v167
    %401 = vmatpush1.msra.mxu0 %v166
    %402 = vmatprep.subr.mxu0 %v171
    %403 = vmatpush1.msra.mxu0 %v170
    %404 = vmatprep.subr.mxu0 %v175
    %405 = vmatpush1.msra.mxu0 %v174
    %406 = vmatprep.subr.mxu0 %v179
    %407 = vmatpush1.msra.mxu0 %v178
    %408 = vmatprep.subr.mxu0 %v183
    %409 = vmatpush1.msra.mxu0 %v182
    %410 = vmatprep.subr.mxu0 %v187
    %411 = vmatpush1.msra.mxu0 %v186
    %412 = vmatprep.subr.mxu0 %v191
    %413 = vmatpush1.msra.mxu0 %v190
    %414 = vmatprep.subr.mxu0 %v195
    %415 = vmatpush1.msra.mxu0 %v194
    %416 = vmatprep.subr.mxu0 %v199
    %417 = vmatpush1.msra.mxu0 %v198
    %418 = vmatprep.subr.mxu0 %v203
    %419 = vmatpush1.msra.mxu0 %v202
    %420 = vmatprep.subr.mxu0 %v207
    %421 = vmatpush1.msra.mxu0 %v206
    %422 = vmatprep.subr.mxu0 %v211
    %423 = vmatpush1.msra.mxu0 %v210
    %424 = vmatprep.subr.mxu0 %v215
    %425 = vmatpush1.msra.mxu0 %v214
    %426 = vmatprep.subr.mxu0 %v219
    %427 = vmatpush1.msra.mxu0 %v218
    %428 = vmatprep.subr.mxu0 %v223
    %429 = vmatpush1.msra.mxu0 %v222
    %430 = vmatprep.subr.mxu0 %v227
    %431 = vmatpush1.msra.mxu0 %v226
    %432 = vmatprep.subr.mxu0 %v231
    %433 = vmatpush1.msra.mxu0 %v230
    %434 = vmatprep.subr.mxu0 %v235
    %435 = vmatpush1.msra.mxu0 %v234
    %436 = vmatprep.subr.mxu0 %v239
    %437 = vmatpush1.msra.mxu0 %v238
    %438 = vmatprep.subr.mxu0 %v243
    %439 = vmatpush1.msra.mxu0 %v242
    %440 = vmatprep.subr.mxu0 %v247
    %441 = vmatpush1.msra.mxu0 %v246
    %442 = vmatprep.subr.mxu0 %v251
    %443 = vmatpush1.msra.mxu0 %v250
    %444 = vmatprep.subr.mxu0 %v255
    %445 = vmatpush1.msra.mxu0 %v254
    %446 = vmatprep.subr.mxu0 %v259
    %447 = vmatpush1.msra.mxu0 %v258
    %448 = vmatprep.subr.mxu0 %v263
    %449 = vmatpush1.msra.mxu0 %v262
    %450 = vmatprep.subr.mxu0 %v267
    %451 = vmatpush1.msra.mxu0 %v266
    %452 = vmatprep.subr.mxu0 %v271
    %453 = vmatpush1.msra.mxu0 %v270
    %454 = vmatprep.subr.mxu0 %v275
    %455 = vmatpush1.msra.mxu0 %v274
    %456 = vmatprep.mubr.f32.mxu0 %v295
    %457 = vmatmul.mubr.f32.gmra.mrb[0].mxu0 %v291
    %v458 = vpop.f32.mrb[0].mxu0
    %v459 = vadd.f32 %v388, %v458
    %v460 = vpop.f32.mrb[0].mxu0
    %v461 = vadd.f32 %v390, %v460
    %462 = vdwg.mxu0
    %463 = vmatprep.subr.mxu0 %v25
    %464 = vmatpush1.msra.mxu0 %v24
    %465 = vmatprep.subr.mxu0 %v29
    %466 = vmatpush1.msra.mxu0 %v28
    %467 = vmatprep.subr.mxu0 %v33
    %468 = vmatpush1.msra.mxu0 %v32
    %469 = vmatprep.subr.mxu0 %v37
    %470 = vmatpush1.msra.mxu0 %v36
    %471 = vmatprep.subr.mxu0 %v41
    %472 = vmatpush1.msra.mxu0 %v40
    %473 = vmatprep.subr.mxu0 %v45
    %474 = vmatpush1.msra.mxu0 %v44
    %475 = vmatprep.subr.mxu0 %v49
    %476 = vmatpush1.msra.mxu0 %v48
    %477 = vmatprep.subr.mxu0 %v53
    %478 = vmatpush1.msra.mxu0 %v52
    %479 = vmatprep.subr.mxu0 %v57
    %480 = vmatpush1.msra.mxu0 %v56
    %481 = vmatprep.subr.mxu0 %v61
    %482 = vmatpush1.msra.mxu0 %v60
    %483 = vmatprep.subr.mxu0 %v65
    %484 = vmatpush1.msra.mxu0 %v64
    %485 = vmatprep.subr.mxu0 %v69
    %486 = vmatpush1.msra.mxu0 %v68
    %487 = vmatprep.subr.mxu0 %v73
    %488 = vmatpush1.msra.mxu0 %v72
    %489 = vmatprep.subr.mxu0 %v77
    %490 = vmatpush1.msra.mxu0 %v76
    %491 = vmatprep.subr.mxu0 %v81
    %492 = vmatpush1.msra.mxu0 %v80
    %493 = vmatprep.subr.mxu0 %v85
    %494 = vmatpush1.msra.mxu0 %v84
    %495 = vmatprep.subr.mxu0 %v89
    %496 = vmatpush1.msra.mxu0 %v88
    %497 = vmatprep.subr.mxu0 %v93
    %498 = vmatpush1.msra.mxu0 %v92
    %499 = vmatprep.subr.mxu0 %v97
    %500 = vmatpush1.msra.mxu0 %v96
    %501 = vmatprep.subr.mxu0 %v101
    %502 = vmatpush1.msra.mxu0 %v100
    %503 = vmatprep.subr.mxu0 %v105
    %504 = vmatpush1.msra.mxu0 %v104
    %505 = vmatprep.subr.mxu0 %v109
    %506 = vmatpush1.msra.mxu0 %v108
    %507 = vmatprep.subr.mxu0 %v113
    %508 = vmatpush1.msra.mxu0 %v112
    %509 = vmatprep.subr.mxu0 %v117
    %510 = vmatpush1.msra.mxu0 %v116
    %511 = vmatprep.subr.mxu0 %v121
    %512 = vmatpush1.msra.mxu0 %v120
    %513 = vmatprep.subr.mxu0 %v125
    %514 = vmatpush1.msra.mxu0 %v124
    %515 = vmatprep.subr.mxu0 %v129
    %516 = vmatpush1.msra.mxu0 %v128
    %517 = vmatprep.subr.mxu0 %v133
    %518 = vmatpush1.msra.mxu0 %v132
    %519 = vmatprep.subr.mxu0 %v137
    %520 = vmatpush1.msra.mxu0 %v136
    %521 = vmatprep.subr.mxu0 %v141
    %522 = vmatpush1.msra.mxu0 %v140
    %523 = vmatprep.subr.mxu0 %v145
    %524 = vmatpush1.msra.mxu0 %v144
    %525 = vmatprep.subr.mxu0 %v149
    %526 = vmatpush1.msra.mxu0 %v148
    %527 = vmatprep.mubr.f32.mxu0 %v287
    %528 = vmatmul.mubr.f32.gmra.mrb[0].mxu0 %v283
    %v529 = vpop.f32.mrb[0].mxu0
    %v530 = vadd.f32 %v312, %v529
    %v531 = vpop.f32.mrb[0].mxu0
    %v532 = vadd.f32 %v316, %v531
    %533 = vdwg.mxu0
    %534 = vmatprep.subr.mxu0 %v153
    %535 = vmatpush1.msra.mxu0 %v152
    %536 = vmatprep.subr.mxu0 %v157
    %537 = vmatpush1.msra.mxu0 %v156
    %538 = vmatprep.subr.mxu0 %v161
    %539 = vmatpush1.msra.mxu0 %v160
    %540 = vmatprep.subr.mxu0 %v165
    %541 = vmatpush1.msra.mxu0 %v164
    %542 = vmatprep.subr.mxu0 %v169
    %543 = vmatpush1.msra.mxu0 %v168
    %544 = vmatprep.subr.mxu0 %v173
    %545 = vmatpush1.msra.mxu0 %v172
    %546 = vmatprep.subr.mxu0 %v177
    %547 = vmatpush1.msra.mxu0 %v176
    %548 = vmatprep.subr.mxu0 %v181
    %549 = vmatpush1.msra.mxu0 %v180
    %550 = vmatprep.subr.mxu0 %v185
    %551 = vmatpush1.msra.mxu0 %v184
    %552 = vmatprep.subr.mxu0 %v189
    %553 = vmatpush1.msra.mxu0 %v188
    %554 = vmatprep.subr.mxu0 %v193
    %555 = vmatpush1.msra.mxu0 %v192
    %556 = vmatprep.subr.mxu0 %v197
    %557 = vmatpush1.msra.mxu0 %v196
    %558 = vmatprep.subr.mxu0 %v201
    %559 = vmatpush1.msra.mxu0 %v200
    %560 = vmatprep.subr.mxu0 %v205
    %561 = vmatpush1.msra.mxu0 %v204
    %562 = vmatprep.subr.mxu0 %v209
    %563 = vmatpush1.msra.mxu0 %v208
    %564 = vmatprep.subr.mxu0 %v213
    %565 = vmatpush1.msra.mxu0 %v212
    %566 = vmatprep.subr.mxu0 %v217
    %567 = vmatpush1.msra.mxu0 %v216
    %568 = vmatprep.subr.mxu0 %v221
    %569 = vmatpush1.msra.mxu0 %v220
    %570 = vmatprep.subr.mxu0 %v225
    %571 = vmatpush1.msra.mxu0 %v224
    %572 = vmatprep.subr.mxu0 %v229
    %573 = vmatpush1.msra.mxu0 %v228
    %574 = vmatprep.subr.mxu0 %v233
    %575 = vmatpush1.msra.mxu0 %v232
    %576 = vmatprep.subr.mxu0 %v237
    %577 = vmatpush1.msra.mxu0 %v236
    %578 = vmatprep.subr.mxu0 %v241
    %579 = vmatpush1.msra.mxu0 %v240
    %580 = vmatprep.subr.mxu0 %v245
    %581 = vmatpush1.msra.mxu0 %v244
    %582 = vmatprep.subr.mxu0 %v249
    %583 = vmatpush1.msra.mxu0 %v248
    %584 = vmatprep.subr.mxu0 %v253
    %585 = vmatpush1.msra.mxu0 %v252
    %586 = vmatprep.subr.mxu0 %v257
    %587 = vmatpush1.msra.mxu0 %v256
    %588 = vmatprep.subr.mxu0 %v261
    %589 = vmatpush1.msra.mxu0 %v260
    %590 = vmatprep.subr.mxu0 %v265
    %591 = vmatpush1.msra.mxu0 %v264
    %592 = vmatprep.subr.mxu0 %v269
    %593 = vmatpush1.msra.mxu0 %v268
    %594 = vmatprep.subr.mxu0 %v273
    %595 = vmatpush1.msra.mxu0 %v272
    %596 = vmatprep.subr.mxu0 %v277
    %597 = vmatpush1.msra.mxu0 %v276
    %598 = vmatprep.mubr.f32.mxu0 %v295
    %599 = vmatmul.mubr.f32.gmra.mrb[0].mxu0 %v291
    %v600 = vpop.f32.mrb[0].mxu0
    %v601 = vadd.f32 %v530, %v600
    %v602 = vpop.f32.mrb[0].mxu0
    %v603 = vadd.f32 %v532, %v602
    %604 = vdwg.mxu0
    %v605 = vmax.f32 %v459, 0.0
    %v606 = vmax.f32 %v461, 0.0
    %v607 = vmax.f32 %v601, 0.0
    %v608 = vmax.f32 %v603, 0.0
    %v609 = vld [vmem:[%s3] sm:$0xff]
    %v610 = vld [vmem:[%s3 + $0x8] sm:$0xff]
    %v611 = vld [vmem:[%s3 + $0x10] sm:$0xff]
    %v612 = vld [vmem:[%s3 + $0x18] sm:$0xff]
    %v613 = vld [vmem:[%s3 + $0x20] sm:$0xff]
    %v614 = vld [vmem:[%s3 + $0x28] sm:$0xff]
    %v615 = vld [vmem:[%s3 + $0x30] sm:$0xff]
    %v616 = vld [vmem:[%s3 + $0x38] sm:$0xff]
    %v617 = vld [vmem:[%s3 + $0x40] sm:$0xff]
    %v618 = vld [vmem:[%s3 + $0x48] sm:$0xff]
    %v619 = vld [vmem:[%s3 + $0x50] sm:$0xff]
    %v620 = vld [vmem:[%s3 + $0x58] sm:$0xff]
    %v621 = vld [vmem:[%s3 + $0x60] sm:$0xff]
    %v622 = vld [vmem:[%s3 + $0x68] sm:$0xff]
    %v623 = vld [vmem:[%s3 + $0x70] sm:$0xff]
    %v624 = vld [vmem:[%s3 + $0x78] sm:$0xff]
    %v625 = vld [vmem:[%s3 + $0x80] sm:$0xff]
    %v626 = vld [vmem:[%s3 + $0x88] sm:$0xff]
    %v627 = vld [vmem:[%s3 + $0x90] sm:$0xff]
    %v628 = vld [vmem:[%s3 + $0x98] sm:$0xff]
    %v629 = vld [vmem:[%s3 + $0xa0] sm:$0xff]
    %v630 = vld [vmem:[%s3 + $0xa8] sm:$0xff]
    %v631 = vld [vmem:[%s3 + $0xb0] sm:$0xff]
    %v632 = vld [vmem:[%s3 + $0xb8] sm:$0xff]
    %v633 = vld [vmem:[%s3 + $0xc0] sm:$0xff]
    %v634 = vld [vmem:[%s3 + $0xc8] sm:$0xff]
    %v635 = vld [vmem:[%s3 + $0xd0] sm:$0xff]
    %v636 = vld [vmem:[%s3 + $0xd8] sm:$0xff]
    %v637 = vld [vmem:[%s3 + $0xe0] sm:$0xff]
    %v638 = vld [vmem:[%s3 + $0xe8] sm:$0xff]
    %v639 = vld [vmem:[%s3 + $0xf0] sm:$0xff]
    %v640 = vld [vmem:[%s3 + $0xf8] sm:$0xff]
    %v641 = vld [vmem:[%s3 + $0x100] sm:$0xff]
    %v642 = vld [vmem:[%s3 + $0x108] sm:$0xff]
    %v643 = vld [vmem:[%s3 + $0x110] sm:$0xff]
    %v644 = vld [vmem:[%s3 + $0x118] sm:$0xff]
    %v645 = vld [vmem:[%s3 + $0x120] sm:$0xff]
    %v646 = vld [vmem:[%s3 + $0x128] sm:$0xff]
    %v647 = vld [vmem:[%s3 + $0x130] sm:$0xff]
    %v648 = vld [vmem:[%s3 + $0x138] sm:$0xff]
    %v649 = vld [vmem:[%s3 + $0x140] sm:$0xff]
    %v650 = vld [vmem:[%s3 + $0x148] sm:$0xff]
    %v651 = vld [vmem:[%s3 + $0x150] sm:$0xff]
    %v652 = vld [vmem:[%s3 + $0x158] sm:$0xff]
    %v653 = vld [vmem:[%s3 + $0x160] sm:$0xff]
    %v654 = vld [vmem:[%s3 + $0x168] sm:$0xff]
    %v655 = vld [vmem:[%s3 + $0x170] sm:$0xff]
    %v656 = vld [vmem:[%s3 + $0x178] sm:$0xff]
    %v657 = vld [vmem:[%s3 + $0x180] sm:$0xff]
    %v658 = vld [vmem:[%s3 + $0x188] sm:$0xff]
    %v659 = vld [vmem:[%s3 + $0x190] sm:$0xff]
    %v660 = vld [vmem:[%s3 + $0x198] sm:$0xff]
    %v661 = vld [vmem:[%s3 + $0x1a0] sm:$0xff]
    %v662 = vld [vmem:[%s3 + $0x1a8] sm:$0xff]
    %v663 = vld [vmem:[%s3 + $0x1b0] sm:$0xff]
    %v664 = vld [vmem:[%s3 + $0x1b8] sm:$0xff]
    %v665 = vld [vmem:[%s3 + $0x1c0] sm:$0xff]
    %v666 = vld [vmem:[%s3 + $0x1c8] sm:$0xff]
    %v667 = vld [vmem:[%s3 + $0x1d0] sm:$0xff]
    %v668 = vld [vmem:[%s3 + $0x1d8] sm:$0xff]
    %v669 = vld [vmem:[%s3 + $0x1e0] sm:$0xff]
    %v670 = vld [vmem:[%s3 + $0x1e8] sm:$0xff]
    %v671 = vld [vmem:[%s3 + $0x1f0] sm:$0xff]
    %v672 = vld [vmem:[%s3 + $0x1f8] sm:$0xff]
    %v673 = vld [vmem:[%s4] sm:$0x1]
    %674 = vmatprep.subr.mxu0 0.0
    %675 = vmatpush1.msra.mxu0 %v609
    %676 = vmatprep.subr.mxu0 0.0
    %677 = vmatpush1.msra.mxu0 %v610
    %678 = vmatprep.subr.mxu0 0.0
    %679 = vmatpush1.msra.mxu0 %v611
    %680 = vmatprep.subr.mxu0 0.0
    %681 = vmatpush1.msra.mxu0 %v612
    %682 = vmatprep.subr.mxu0 0.0
    %683 = vmatpush1.msra.mxu0 %v613
    %684 = vmatprep.subr.mxu0 0.0
    %685 = vmatpush1.msra.mxu0 %v614
    %686 = vmatprep.subr.mxu0 0.0
    %687 = vmatpush1.msra.mxu0 %v615
    %688 = vmatprep.subr.mxu0 0.0
    %689 = vmatpush1.msra.mxu0 %v616
    %690 = vmatprep.subr.mxu0 0.0
    %691 = vmatpush1.msra.mxu0 %v617
    %692 = vmatprep.subr.mxu0 0.0
    %693 = vmatpush1.msra.mxu0 %v618
    %694 = vmatprep.subr.mxu0 0.0
    %695 = vmatpush1.msra.mxu0 %v619
    %696 = vmatprep.subr.mxu0 0.0
    %697 = vmatpush1.msra.mxu0 %v620
    %698 = vmatprep.subr.mxu0 0.0
    %699 = vmatpush1.msra.mxu0 %v621
    %700 = vmatprep.subr.mxu0 0.0
    %701 = vmatpush1.msra.mxu0 %v622
    %702 = vmatprep.subr.mxu0 0.0
    %703 = vmatpush1.msra.mxu0 %v623
    %704 = vmatprep.subr.mxu0 0.0
    %705 = vmatpush1.msra.mxu0 %v624
    %706 = vmatprep.subr.mxu0 0.0
    %707 = vmatpush1.msra.mxu0 %v625
    %708 = vmatprep.subr.mxu0 0.0
    %709 = vmatpush1.msra.mxu0 %v626
    %710 = vmatprep.subr.mxu0 0.0
    %711 = vmatpush1.msra.mxu0 %v627
    %712 = vmatprep.subr.mxu0 0.0
    %713 = vmatpush1.msra.mxu0 %v628
    %714 = vmatprep.subr.mxu0 0.0
    %715 = vmatpush1.msra.mxu0 %v629
    %716 = vmatprep.subr.mxu0 0.0
    %717 = vmatpush1.msra.mxu0 %v630
    %718 = vmatprep.subr.mxu0 0.0
    %719 = vmatpush1.msra.mxu0 %v631
    %720 = vmatprep.subr.mxu0 0.0
    %721 = vmatpush1.msra.mxu0 %v632
    %722 = vmatprep.subr.mxu0 0.0
    %723 = vmatpush1.msra.mxu0 %v633
    %724 = vmatprep.subr.mxu0 0.0
    %725 = vmatpush1.msra.mxu0 %v634
    %726 = vmatprep.subr.mxu0 0.0
    %727 = vmatpush1.msra.mxu0 %v635
    %728 = vmatprep.subr.mxu0 0.0
    %729 = vmatpush1.msra.mxu0 %v636
    %730 = vmatprep.subr.mxu0 0.0
    %731 = vmatpush1.msra.mxu0 %v637
    %732 = vmatprep.subr.mxu0 0.0
    %733 = vmatpush1.msra.mxu0 %v638
    %734 = vmatprep.subr.mxu0 0.0
    %735 = vmatpush1.msra.mxu0 %v639
    %736 = vmatprep.subr.mxu0 0.0
    %737 = vmatpush1.msra.mxu0 %v640
    %738 = vmatprep.mubr.f32.mxu0 %v606
    %739 = vmatmul.mubr.f32.gmra.mrb[0].mxu0 %v605
    %v740 = vpop.f32.mrb[0].mxu0
    %v741 = vadd.f32 %v673, %v740
    %v742 = vpop.f32.mrb[0].mxu0
    %743 = vdwg.mxu0
    %744 = vmatprep.subr.mxu0 0.0
    %745 = vmatpush1.msra.mxu0 %v641
    %746 = vmatprep.subr.mxu0 0.0
    %747 = vmatpush1.msra.mxu0 %v642
    %748 = vmatprep.subr.mxu0 0.0
    %749 = vmatpush1.msra.mxu0 %v643
    %750 = vmatprep.subr.mxu0 0.0
    %751 = vmatpush1.msra.mxu0 %v644
    %752 = vmatprep.subr.mxu0 0.0
    %753 = vmatpush1.msra.mxu0 %v645
    %754 = vmatprep.subr.mxu0 0.0
    %755 = vmatpush1.msra.mxu0 %v646
    %756 = vmatprep.subr.mxu0 0.0
    %757 = vmatpush1.msra.mxu0 %v647
    %758 = vmatprep.subr.mxu0 0.0
    %759 = vmatpush1.msra.mxu0 %v648
    %760 = vmatprep.subr.mxu0 0.0
    %761 = vmatpush1.msra.mxu0 %v649
    %762 = vmatprep.subr.mxu0 0.0
    %763 = vmatpush1.msra.mxu0 %v650
    %764 = vmatprep.subr.mxu0 0.0
    %765 = vmatpush1.msra.mxu0 %v651
    %766 = vmatprep.subr.mxu0 0.0
    %767 = vmatpush1.msra.mxu0 %v652
    %768 = vmatprep.subr.mxu0 0.0
    %769 = vmatpush1.msra.mxu0 %v653
    %770 = vmatprep.subr.mxu0 0.0
    %771 = vmatpush1.msra.mxu0 %v654
    %772 = vmatprep.subr.mxu0 0.0
    %773 = vmatpush1.msra.mxu0 %v655
    %774 = vmatprep.subr.mxu0 0.0
    %775 = vmatpush1.msra.mxu0 %v656
    %776 = vmatprep.subr.mxu0 0.0
    %777 = vmatpush1.msra.mxu0 %v657
    %778 = vmatprep.subr.mxu0 0.0
    %779 = vmatpush1.msra.mxu0 %v658
    %780 = vmatprep.subr.mxu0 0.0
    %781 = vmatpush1.msra.mxu0 %v659
    %782 = vmatprep.subr.mxu0 0.0
    %783 = vmatpush1.msra.mxu0 %v660
    %784 = vmatprep.subr.mxu0 0.0
    %785 = vmatpush1.msra.mxu0 %v661
    %786 = vmatprep.subr.mxu0 0.0
    %787 = vmatpush1.msra.mxu0 %v662
    %788 = vmatprep.subr.mxu0 0.0
    %789 = vmatpush1.msra.mxu0 %v663
    %790 = vmatprep.subr.mxu0 0.0
    %791 = vmatpush1.msra.mxu0 %v664
    %792 = vmatprep.subr.mxu0 0.0
    %793 = vmatpush1.msra.mxu0 %v665
    %794 = vmatprep.subr.mxu0 0.0
    %795 = vmatpush1.msra.mxu0 %v666
    %796 = vmatprep.subr.mxu0 0.0
    %797 = vmatpush1.msra.mxu0 %v667
    %798 = vmatprep.subr.mxu0 0.0
    %799 = vmatpush1.msra.mxu0 %v668
    %800 = vmatprep.subr.mxu0 0.0
    %801 = vmatpush1.msra.mxu0 %v669
    %802 = vmatprep.subr.mxu0 0.0
    %803 = vmatpush1.msra.mxu0 %v670
    %804 = vmatprep.subr.mxu0 0.0
    %805 = vmatpush1.msra.mxu0 %v671
    %806 = vmatprep.subr.mxu0 0.0
    %807 = vmatpush1.msra.mxu0 %v672
    %808 = vmatprep.mubr.f32.mxu0 %v608
    %809 = vmatmul.mubr.f32.gmra.mrb[0].mxu0 %v607
    %v810 = vpop.f32.mrb[0].mxu0
    %v811 = vadd.f32 %v741, %v810
    %v812 = vpop.f32.mrb[0].mxu0
    %813 = vdwg.mxu0
    %vm814 = vcmask 8192
    %815 = vst.msk [vmem:[#allocation2] sm:$0x1] %vm814, %v811
    // Predicated region
    $region22: #{_lambda_.3} parent=1 // pred_check
      _
    $region23: #{_lambda_.3} parent=1 // pred_check_branch
      %817 = sbr.rel (0) target = $region25
    $region24: #{_lambda_.3} parent=1 // pred_region
      %s819 = ssub.s32 16, 16
      %820 = vsyncadd [#allocation3], %s819
      %s822 = sshll.u32 [#allocation2], 4
      %s823 = int_to_ptr.vmem [resolvable:$true] %s822
      %825 = dma.vmem_to_hbm [thread:$0]  %s823, 16, %s5, [#allocation3]
    $region25: #{_lambda_.3} parent=1 // pred_fallthru
      _
    // Predicated region
    $region26: #{_lambda_.3} parent=1 // pred_check
      _
    $region27: #{_lambda_.3} parent=1 // pred_check_branch
      %827 = sbr.rel (0) target = $region29
    $region28: #{_lambda_.3} parent=1 // pred_region
      %828 = dma.done [#allocation3], 16
    $region29: #{_lambda_.3} parent=1 // pred_fallthru
      _
    %829 = vsyncpa [#allocation3], 1

</llo_original>
